<compile_context>
chip_gen: v7x
topology: tpu7x:2x2x1
jax: 0.10.0
libtpu: 0.0.40
codegen_flags: <defaults>
</compile_context>

<pallas_src>
import jax
import jax.numpy as jnp
from jax import lax
from jax.experimental import pallas as pl
from jax.experimental.pallas import tpu as pltpu
import numpy as np


def make_rdb_kernel(G0, G, C, L, shifts):
    Ctot = G0 + C * G

    def kernel(*refs):
        mask_ref = refs[0]                    # (1, L)  1.0 on interior pixels
        x_ref = refs[1]                       # (G0, L) padded + packed input
        conv_refs = refs[2:2 + 2 * C]         # per layer: w (9*G, cin), b (G, 1)
        wlff_ref = refs[2 + 2 * C]            # (G0, Ctot)
        blff_ref = refs[3 + 2 * C]            # (G0, 1)
        out_ref = refs[4 + 2 * C]             # (G0, L)
        feat_ref = refs[5 + 2 * C]            # scratch (Ctot, L)

        mask = mask_ref[...]                  # (1, L)
        x = x_ref[...]                        # (G0, L) f32 (kept for residual)

        # Growing feature map.  Every element that is ever read is written
        # first inside this grid step, so no scratch zeroing is needed.
        feat_ref[0:G0, :] = x.astype(feat_ref.dtype)

        for c in range(C):
            cin = G0 + c * G
            w_ref = conv_refs[2 * c]          # (9*G, cin) fused tap weights
            b_ref = conv_refs[2 * c + 1]      # (G, 1)

            # ONE matmul per layer over the whole packed image group.
            r = jnp.dot(w_ref[...], feat_ref[0:cin, :],
                        preferred_element_type=jnp.float32)       # (9*G, L)

            # Combine the 9 taps with static lane rolls (XLU) + adds (VPU):
            #   acc[:, q] = sum_t r[t*G:(t+1)*G, q + s_t]
            # Circular wrap / cross-image leakage only hits halo / lane-pad
            # pixels, which the mask below zeroes.
            acc = None
            for t, s in enumerate(shifts):
                g = r[t * G:(t + 1) * G, :]                       # (G, L)
                sh = (-s) % L
                if sh:
                    g = pltpu.roll(g, shift=sh, axis=1)
                acc = g if acc is None else acc + g

            # Bias + ReLU once per layer; the interior mask restores the zero
            # halo so the next layer's taps see correct 'SAME' padding.
            out_c = jnp.maximum(acc + b_ref[...], 0.0) * mask
            # torch.cat((x, out), 1): append G new channel rows (sublane axis).
            feat_ref[cin:cin + G, :] = out_c.astype(feat_ref.dtype)

        # Local feature fusion (1x1 conv over all Ctot channels) + residual.
        y = jnp.dot(wlff_ref[...], feat_ref[...],
                    preferred_element_type=jnp.float32)           # (G0, L)
        out_ref[...] = y + blff_ref[...] + x

    return kernel


def rdb_pallas(x_nchw, conv_params, lff_w, lff_b, *, images_per_step=None,
               compute_dtype=jnp.float32, lane_budget=512):
    """x_nchw: (N, G0, H, W).  conv_params: list of (w:(3,3,Cin,G) HWIO, b:(G,))."""
    x = x_nchw.astype(jnp.float32)
    N, G0, H, W = x.shape
    C = len(conv_params)
    G = conv_params[0][0].shape[-1]
    Ctot = G0 + C * G
    Hp, Wp = H + 2, W + 2
    P = Hp * Wp
    # Pad the flattened padded-spatial extent to a lane-tile multiple so every
    # load/store is lane-dense (no vst.msk partial tiles).
    Ppad = ((P + 127) // 128) * 128

    # Images packed per grid step: amortizes per-step overhead and widens the
    # matmul N dim, but keep >= 2 grid steps when N >= 2 so both v7x cores eat.
    if images_per_step is None:
        B = max(1, min(max(N // 2, 1), max(lane_budget // Ppad, 1)))
    else:
        B = images_per_step
    B = max(1, min(B, N))
    Ng = -(-N // B)
    Npad = Ng * B
    L = B * Ppad

    # Flat-lane shift of each 3x3 tap (dy, dx), row-major, matching the
    # (3,3,G,cin) -> (9*G, cin) weight reshape below.
    shifts = [(dy - 1) * Wp + (dx - 1) for dy in range(3) for dx in range(3)]

    # Zero-pad spatially once in the wrapper, flatten (Hp, Wp) onto lanes, pad
    # lanes to Ppad, pad batch to Npad, and pack B images per lane row.
    x_sp = jnp.pad(x, ((0, 0), (0, 0), (1, 1), (1, 1))).reshape(N, G0, P)
    x_sp = jnp.pad(x_sp, ((0, Npad - N), (0, 0), (0, Ppad - P)))
    x_packed = (x_sp.reshape(Ng, B, G0, Ppad)
                    .transpose(0, 2, 1, 3)
                    .reshape(Ng, G0, L))

    # Interior-pixel mask: 1 inside the original HxW image, 0 on the halo and
    # on the lane padding; tiled once per packed image.
    mask1 = jnp.pad(jnp.pad(jnp.ones((H, W), jnp.float32),
                            ((1, 1), (1, 1))).reshape(P), (0, Ppad - P))
    mask = jnp.tile(mask1, (B,)).reshape(1, L)

    flat_args = [mask, x_packed]
    in_specs = [
        pl.BlockSpec((1, L), lambda n: (0, 0)),
        pl.BlockSpec((None, G0, L), lambda n: (n, 0, 0)),
    ]
    for (w, b) in conv_params:
        cin = w.shape[2]
        # HWIO (3,3,cin,G) -> (9*G, cin): fused per-layer matmul LHS with the
        # contraction dim (cin) on lanes; no per-tap weight slicing in-kernel.
        wk = (jnp.transpose(w.astype(compute_dtype), (0, 1, 3, 2))
                 .reshape(9 * G, cin))
        bk = b.astype(jnp.float32).reshape(G, 1)
        flat_args += [wk, bk]
        in_specs += [
            pl.BlockSpec((9 * G, cin), lambda n: (0, 0)),
            pl.BlockSpec((G, 1), lambda n: (0, 0)),
        ]
    flat_args += [jnp.transpose(lff_w.astype(compute_dtype), (1, 0)),  # (G0, Ctot)
                  lff_b.astype(jnp.float32).reshape(G0, 1)]
    in_specs += [
        pl.BlockSpec((G0, Ctot), lambda n: (0, 0)),
        pl.BlockSpec((G0, 1), lambda n: (0, 0)),
    ]

    out = pl.pallas_call(
        make_rdb_kernel(G0, G, C, L, shifts),
        out_shape=jax.ShapeDtypeStruct((Ng, G0, L), jnp.float32),
        grid_spec=pltpu.PrefetchScalarGridSpec(
            num_scalar_prefetch=0,
            grid=(Ng,),
            in_specs=in_specs,
            out_specs=pl.BlockSpec((None, G0, L), lambda n: (n, 0, 0)),
            scratch_shapes=[pltpu.VMEM((Ctot, L), compute_dtype)],
        ),
        compiler_params=pltpu.CompilerParams(
            dimension_semantics=("parallel",)),
    )(*flat_args)

    # Unpack images, drop lane padding and the spatial halo (already NCHW).
    out = (out.reshape(Ng, G0, B, Ppad)
              .transpose(0, 2, 1, 3)
              .reshape(Npad, G0, Ppad))
    out = out[:N, :, :P].reshape(N, G0, Hp, Wp)[:, :, 1:H + 1, 1:W + 1]
    return out


def rdb_reference(x_nchw, conv_params, lff_w, lff_b):
    """Pure-JAX reference (NHWC convs), mirrors the PyTorch RDB forward."""
    x = jnp.transpose(x_nchw, (0, 2, 3, 1)).astype(jnp.float32)
    feat = x
    for (w, b) in conv_params:
        out = lax.conv_general_dilated(
            feat, w, window_strides=(1, 1), padding='SAME',
            dimension_numbers=('NHWC', 'HWIO', 'NHWC')) + b
        out = jnp.maximum(out, 0.0)
        feat = jnp.concatenate([feat, out], axis=-1)     # torch.cat((x, out), 1)
    Ctot, G0 = lff_w.shape
    y = lax.conv_general_dilated(
        feat, lff_w.reshape(1, 1, Ctot, G0), window_strides=(1, 1),
        padding='SAME', dimension_numbers=('NHWC', 'HWIO', 'NHWC')) + lff_b
    y = y + x
    return jnp.transpose(y, (0, 3, 1, 2))


if __name__ == "__main__":
    # Module config: RDB(growRate0=8, growRate=4, nConvLayers=3, kSize=3)
    N, G0, G, C, H, W = 2, 8, 4, 3, 16, 16
    Ctot = G0 + C * G

    key = jax.random.PRNGKey(0)
    keys = jax.random.split(key, 2 * C + 3)

    # Deterministic parameter init (weights stored as (KH, KW, Cin, G), i.e.
    # PyTorch's (G, Cin, KH, KW) permuted to HWIO).
    conv_params = []
    for c in range(C):
        cin = G0 + c * G
        w = 0.1 * jax.random.normal(keys[2 * c], (3, 3, cin, G), jnp.float32)
        b = 0.1 * jax.random.normal(keys[2 * c + 1], (G,), jnp.float32)
        conv_params.append((w, b))
    lff_w = 0.1 * jax.random.normal(keys[2 * C], (Ctot, G0), jnp.float32)
    lff_b = 0.1 * jax.random.normal(keys[2 * C + 1], (G0,), jnp.float32)

    # Input in PyTorch NCHW layout.
    x = jax.random.normal(keys[2 * C + 2], (N, G0, H, W), jnp.float32)

    y_kernel = jax.block_until_ready(rdb_pallas(x, conv_params, lff_w, lff_b))
    y_ref = jax.block_until_ready(rdb_reference(x, conv_params, lff_w, lff_b))
    assert y_kernel.shape == (N, G0, H, W)
    max_err = float(jnp.max(jnp.abs(y_kernel - y_ref)))
    assert np.isfinite(max_err) and max_err < 1e-3, f"mismatch: {max_err}"

    # Second check: odd batch / non-square image exercises image packing
    # (B > 1), non-divisible batch and lane-padding paths.
    N2, H2, W2 = 5, 10, 12
    x2 = jax.random.normal(jax.random.PRNGKey(1), (N2, G0, H2, W2), jnp.float32)
    y2_kernel = jax.block_until_ready(rdb_pallas(x2, conv_params, lff_w, lff_b))
    y2_ref = jax.block_until_ready(rdb_reference(x2, conv_params, lff_w, lff_b))
    assert y2_kernel.shape == (N2, G0, H2, W2)
    max_err2 = float(jnp.max(jnp.abs(y2_kernel - y2_ref)))
    assert np.isfinite(max_err2) and max_err2 < 1e-3, f"mismatch: {max_err2}"

    print("KERNEL_OK")
</pallas_src>

<mosaic_0001>
module attributes {stable_mosaic.version = 11 : i64} {
  func.func @kernel(%arg0: i32, %arg1: memref<1x384xf32, #tpu.memory_space<vmem>>, %arg2: memref<1x8x384xf32, #tpu.memory_space<vmem>>, %arg3: memref<36x8xf32, #tpu.memory_space<vmem>>, %arg4: memref<4x1xf32, #tpu.memory_space<vmem>>, %arg5: memref<36x12xf32, #tpu.memory_space<vmem>>, %arg6: memref<4x1xf32, #tpu.memory_space<vmem>>, %arg7: memref<36x16xf32, #tpu.memory_space<vmem>>, %arg8: memref<4x1xf32, #tpu.memory_space<vmem>>, %arg9: memref<8x20xf32, #tpu.memory_space<vmem>>, %arg10: memref<8x1xf32, #tpu.memory_space<vmem>>, %arg11: memref<1x8x384xf32, #tpu.memory_space<vmem>>, %arg12: memref<20x384xf32, #tpu.memory_space<vmem>>) attributes {dimension_semantics = [#tpu.dimension_semantics<parallel>], iteration_bounds = array<i64: 2>, scalar_prefetch = 0 : i64, scratch_operands = 1 : i64, tpu.core_type = #tpu.core_type<tc>, window_params = [{pipeline_mode = #tpu.pipeline_mode<synchronous>, transform_indices = @transform_0, window_bounds = array<i64: 1, 384>}, {transform_indices = @transform_1, window_bounds = array<i64: 1, 8, 384>}, {pipeline_mode = #tpu.pipeline_mode<synchronous>, transform_indices = @transform_2, window_bounds = array<i64: 36, 8>}, {pipeline_mode = #tpu.pipeline_mode<synchronous>, transform_indices = @transform_3, window_bounds = array<i64: 4, 1>}, {pipeline_mode = #tpu.pipeline_mode<synchronous>, transform_indices = @transform_4, window_bounds = array<i64: 36, 12>}, {pipeline_mode = #tpu.pipeline_mode<synchronous>, transform_indices = @transform_5, window_bounds = array<i64: 4, 1>}, {pipeline_mode = #tpu.pipeline_mode<synchronous>, transform_indices = @transform_6, window_bounds = array<i64: 36, 16>}, {pipeline_mode = #tpu.pipeline_mode<synchronous>, transform_indices = @transform_7, window_bounds = array<i64: 4, 1>}, {pipeline_mode = #tpu.pipeline_mode<synchronous>, transform_indices = @transform_8, window_bounds = array<i64: 8, 20>}, {pipeline_mode = #tpu.pipeline_mode<synchronous>, transform_indices = @transform_9, window_bounds = array<i64: 8, 1>}, {transform_indices = @transform_10, window_bounds = array<i64: 1, 8, 384>}]} {
    %c0 = arith.constant 0 : index
    %c0_0 = arith.constant 0 : index
    %0 = vector.load %arg1[%c0, %c0_0] : memref<1x384xf32, #tpu.memory_space<vmem>>, vector<1x384xf32>
    %c0_1 = arith.constant 0 : index
    %c0_2 = arith.constant 0 : index
    %c0_3 = arith.constant 0 : index
    %1 = vector.load %arg2[%c0_1, %c0_2, %c0_3] : memref<1x8x384xf32, #tpu.memory_space<vmem>>, vector<1x8x384xf32>
    %2 = vector.shape_cast %1 : vector<1x8x384xf32> to vector<8x384xf32>
    %c0_4 = arith.constant 0 : index
    %c0_5 = arith.constant 0 : index
    %3 = vector.load %arg12[%c0_4, %c0_5] : memref<20x384xf32, #tpu.memory_space<vmem>>, vector<8x384xf32>
    tpu.vector_store %arg12[%c0_4, %c0_5], %2 {strides = array<i32>} : memref<20x384xf32, #tpu.memory_space<vmem>>, vector<8x384xf32>,
    %c0_6 = arith.constant 0 : index
    %c0_7 = arith.constant 0 : index
    %4 = vector.load %arg3[%c0_6, %c0_7] : memref<36x8xf32, #tpu.memory_space<vmem>>, vector<36x8xf32>
    %c0_8 = arith.constant 0 : index
    %c0_9 = arith.constant 0 : index
    %5 = vector.load %arg12[%c0_8, %c0_9] : memref<20x384xf32, #tpu.memory_space<vmem>>, vector<8x384xf32>
    %cst = arith.constant dense<0.000000e+00> : vector<36x384xf32>
    %6 = tpu.matmul %4, %5, %cst {dimension_numbers = #tpu.dot_dimension_numbers<[1], [0], [0], [1], [0, 0, 1, 1], [], []>} : vector<36x8xf32>, vector<8x384xf32>, vector<36x384xf32> -> vector<36x384xf32>
    %7 = vector.extract_strided_slice %6 {offsets = [0, 0], sizes = [4, 384], strides = [1, 1]} : vector<36x384xf32> to vector<4x384xf32>
    %c19_i32 = arith.constant 19 : i32
    %8 = tpu.dynamic_rotate %7 by %c19_i32 dim 1 : vector<4x384xf32>, i32 -> vector<4x384xf32>
    %9 = vector.extract_strided_slice %6 {offsets = [4, 0], sizes = [4, 384], strides = [1, 1]} : vector<36x384xf32> to vector<4x384xf32>
    %c18_i32 = arith.constant 18 : i32
    %10 = tpu.dynamic_rotate %9 by %c18_i32 dim 1 : vector<4x384xf32>, i32 -> vector<4x384xf32>
    %11 = arith.addf %8, %10 : vector<4x384xf32>
    %12 = vector.extract_strided_slice %6 {offsets = [8, 0], sizes = [4, 384], strides = [1, 1]} : vector<36x384xf32> to vector<4x384xf32>
    %c17_i32 = arith.constant 17 : i32
    %13 = tpu.dynamic_rotate %12 by %c17_i32 dim 1 : vector<4x384xf32>, i32 -> vector<4x384xf32>
    %14 = arith.addf %11, %13 : vector<4x384xf32>
    %15 = vector.extract_strided_slice %6 {offsets = [12, 0], sizes = [4, 384], strides = [1, 1]} : vector<36x384xf32> to vector<4x384xf32>
    %c1_i32 = arith.constant 1 : i32
    %16 = tpu.dynamic_rotate %15 by %c1_i32 dim 1 : vector<4x384xf32>, i32 -> vector<4x384xf32>
    %17 = arith.addf %14, %16 : vector<4x384xf32>
    %18 = vector.extract_strided_slice %6 {offsets = [16, 0], sizes = [4, 384], strides = [1, 1]} : vector<36x384xf32> to vector<4x384xf32>
    %19 = arith.addf %17, %18 : vector<4x384xf32>
    %20 = vector.extract_strided_slice %6 {offsets = [20, 0], sizes = [4, 384], strides = [1, 1]} : vector<36x384xf32> to vector<4x384xf32>
    %c383_i32 = arith.constant 383 : i32
    %21 = tpu.dynamic_rotate %20 by %c383_i32 dim 1 : vector<4x384xf32>, i32 -> vector<4x384xf32>
    %22 = arith.addf %19, %21 : vector<4x384xf32>
    %23 = vector.extract_strided_slice %6 {offsets = [24, 0], sizes = [4, 384], strides = [1, 1]} : vector<36x384xf32> to vector<4x384xf32>
    %c367_i32 = arith.constant 367 : i32
    %24 = tpu.dynamic_rotate %23 by %c367_i32 dim 1 : vector<4x384xf32>, i32 -> vector<4x384xf32>
    %25 = arith.addf %22, %24 : vector<4x384xf32>
    %26 = vector.extract_strided_slice %6 {offsets = [28, 0], sizes = [4, 384], strides = [1, 1]} : vector<36x384xf32> to vector<4x384xf32>
    %c366_i32 = arith.constant 366 : i32
    %27 = tpu.dynamic_rotate %26 by %c366_i32 dim 1 : vector<4x384xf32>, i32 -> vector<4x384xf32>
    %28 = arith.addf %25, %27 : vector<4x384xf32>
    %29 = vector.extract_strided_slice %6 {offsets = [32, 0], sizes = [4, 384], strides = [1, 1]} : vector<36x384xf32> to vector<4x384xf32>
    %c365_i32 = arith.constant 365 : i32
    %30 = tpu.dynamic_rotate %29 by %c365_i32 dim 1 : vector<4x384xf32>, i32 -> vector<4x384xf32>
    %31 = arith.addf %28, %30 : vector<4x384xf32>
    %c0_10 = arith.constant 0 : index
    %c0_11 = arith.constant 0 : index
    %32 = vector.load %arg4[%c0_10, %c0_11] : memref<4x1xf32, #tpu.memory_space<vmem>>, vector<4x1xf32>
    %33 = vector.broadcast %32 : vector<4x1xf32> to vector<4x384xf32>
    %34 = arith.addf %31, %33 : vector<4x384xf32>
    %cst_12 = arith.constant 0.000000e+00 : f32
    %35 = vector.broadcast %cst_12 : f32 to vector<4x384xf32>
    %36 = arith.maximumf %34, %35 : vector<4x384xf32>
    %37 = vector.broadcast %0 : vector<1x384xf32> to vector<4x384xf32>
    %38 = arith.mulf %36, %37 : vector<4x384xf32>
    %c8 = arith.constant 8 : index
    %c0_13 = arith.constant 0 : index
    %39 = vector.load %arg12[%c8, %c0_13] : memref<20x384xf32, #tpu.memory_space<vmem>>, vector<4x384xf32>
    tpu.vector_store %arg12[%c8, %c0_13], %38 {strides = array<i32>} : memref<20x384xf32, #tpu.memory_space<vmem>>, vector<4x384xf32>,
    %c0_14 = arith.constant 0 : index
    %c0_15 = arith.constant 0 : index
    %40 = vector.load %arg5[%c0_14, %c0_15] : memref<36x12xf32, #tpu.memory_space<vmem>>, vector<36x12xf32>
    %c0_16 = arith.constant 0 : index
    %c0_17 = arith.constant 0 : index
    %41 = vector.load %arg12[%c0_16, %c0_17] : memref<20x384xf32, #tpu.memory_space<vmem>>, vector<12x384xf32>
    %cst_18 = arith.constant dense<0.000000e+00> : vector<36x384xf32>
    %42 = tpu.matmul %40, %41, %cst_18 {dimension_numbers = #tpu.dot_dimension_numbers<[1], [0], [0], [1], [0, 0, 1, 1], [], []>} : vector<36x12xf32>, vector<12x384xf32>, vector<36x384xf32> -> vector<36x384xf32>
    %43 = vector.extract_strided_slice %42 {offsets = [0, 0], sizes = [4, 384], strides = [1, 1]} : vector<36x384xf32> to vector<4x384xf32>
    %c19_i32_19 = arith.constant 19 : i32
    %44 = tpu.dynamic_rotate %43 by %c19_i32_19 dim 1 : vector<4x384xf32>, i32 -> vector<4x384xf32>
    %45 = vector.extract_strided_slice %42 {offsets = [4, 0], sizes = [4, 384], strides = [1, 1]} : vector<36x384xf32> to vector<4x384xf32>
    %c18_i32_20 = arith.constant 18 : i32
    %46 = tpu.dynamic_rotate %45 by %c18_i32_20 dim 1 : vector<4x384xf32>, i32 -> vector<4x384xf32>
    %47 = arith.addf %44, %46 : vector<4x384xf32>
    %48 = vector.extract_strided_slice %42 {offsets = [8, 0], sizes = [4, 384], strides = [1, 1]} : vector<36x384xf32> to vector<4x384xf32>
    %c17_i32_21 = arith.constant 17 : i32
    %49 = tpu.dynamic_rotate %48 by %c17_i32_21 dim 1 : vector<4x384xf32>, i32 -> vector<4x384xf32>
    %50 = arith.addf %47, %49 : vector<4x384xf32>
    %51 = vector.extract_strided_slice %42 {offsets = [12, 0], sizes = [4, 384], strides = [1, 1]} : vector<36x384xf32> to vector<4x384xf32>
    %c1_i32_22 = arith.constant 1 : i32
    %52 = tpu.dynamic_rotate %51 by %c1_i32_22 dim 1 : vector<4x384xf32>, i32 -> vector<4x384xf32>
    %53 = arith.addf %50, %52 : vector<4x384xf32>
    %54 = vector.extract_strided_slice %42 {offsets = [16, 0], sizes = [4, 384], strides = [1, 1]} : vector<36x384xf32> to vector<4x384xf32>
    %55 = arith.addf %53, %54 : vector<4x384xf32>
    %56 = vector.extract_strided_slice %42 {offsets = [20, 0], sizes = [4, 384], strides = [1, 1]} : vector<36x384xf32> to vector<4x384xf32>
    %c383_i32_23 = arith.constant 383 : i32
    %57 = tpu.dynamic_rotate %56 by %c383_i32_23 dim 1 : vector<4x384xf32>, i32 -> vector<4x384xf32>
    %58 = arith.addf %55, %57 : vector<4x384xf32>
    %59 = vector.extract_strided_slice %42 {offsets = [24, 0], sizes = [4, 384], strides = [1, 1]} : vector<36x384xf32> to vector<4x384xf32>
    %c367_i32_24 = arith.constant 367 : i32
    %60 = tpu.dynamic_rotate %59 by %c367_i32_24 dim 1 : vector<4x384xf32>, i32 -> vector<4x384xf32>
    %61 = arith.addf %58, %60 : vector<4x384xf32>
    %62 = vector.extract_strided_slice %42 {offsets = [28, 0], sizes = [4, 384], strides = [1, 1]} : vector<36x384xf32> to vector<4x384xf32>
    %c366_i32_25 = arith.constant 366 : i32
    %63 = tpu.dynamic_rotate %62 by %c366_i32_25 dim 1 : vector<4x384xf32>, i32 -> vector<4x384xf32>
    %64 = arith.addf %61, %63 : vector<4x384xf32>
    %65 = vector.extract_strided_slice %42 {offsets = [32, 0], sizes = [4, 384], strides = [1, 1]} : vector<36x384xf32> to vector<4x384xf32>
    %c365_i32_26 = arith.constant 365 : i32
    %66 = tpu.dynamic_rotate %65 by %c365_i32_26 dim 1 : vector<4x384xf32>, i32 -> vector<4x384xf32>
    %67 = arith.addf %64, %66 : vector<4x384xf32>
    %c0_27 = arith.constant 0 : index
    %c0_28 = arith.constant 0 : index
    %68 = vector.load %arg6[%c0_27, %c0_28] : memref<4x1xf32, #tpu.memory_space<vmem>>, vector<4x1xf32>
    %69 = vector.broadcast %68 : vector<4x1xf32> to vector<4x384xf32>
    %70 = arith.addf %67, %69 : vector<4x384xf32>
    %cst_29 = arith.constant 0.000000e+00 : f32
    %71 = vector.broadcast %cst_29 : f32 to vector<4x384xf32>
    %72 = arith.maximumf %70, %71 : vector<4x384xf32>
    %73 = vector.broadcast %0 : vector<1x384xf32> to vector<4x384xf32>
    %74 = arith.mulf %72, %73 : vector<4x384xf32>
    %c12 = arith.constant 12 : index
    %c0_30 = arith.constant 0 : index
    %75 = vector.load %arg12[%c12, %c0_30] : memref<20x384xf32, #tpu.memory_space<vmem>>, vector<4x384xf32>
    tpu.vector_store %arg12[%c12, %c0_30], %74 {strides = array<i32>} : memref<20x384xf32, #tpu.memory_space<vmem>>, vector<4x384xf32>,
    %c0_31 = arith.constant 0 : index
    %c0_32 = arith.constant 0 : index
    %76 = vector.load %arg7[%c0_31, %c0_32] : memref<36x16xf32, #tpu.memory_space<vmem>>, vector<36x16xf32>
    %c0_33 = arith.constant 0 : index
    %c0_34 = arith.constant 0 : index
    %77 = vector.load %arg12[%c0_33, %c0_34] : memref<20x384xf32, #tpu.memory_space<vmem>>, vector<16x384xf32>
    %cst_35 = arith.constant dense<0.000000e+00> : vector<36x384xf32>
    %78 = tpu.matmul %76, %77, %cst_35 {dimension_numbers = #tpu.dot_dimension_numbers<[1], [0], [0], [1], [0, 0, 1, 1], [], []>} : vector<36x16xf32>, vector<16x384xf32>, vector<36x384xf32> -> vector<36x384xf32>
    %79 = vector.extract_strided_slice %78 {offsets = [0, 0], sizes = [4, 384], strides = [1, 1]} : vector<36x384xf32> to vector<4x384xf32>
    %c19_i32_36 = arith.constant 19 : i32
    %80 = tpu.dynamic_rotate %79 by %c19_i32_36 dim 1 : vector<4x384xf32>, i32 -> vector<4x384xf32>
    %81 = vector.extract_strided_slice %78 {offsets = [4, 0], sizes = [4, 384], strides = [1, 1]} : vector<36x384xf32> to vector<4x384xf32>
    %c18_i32_37 = arith.constant 18 : i32
    %82 = tpu.dynamic_rotate %81 by %c18_i32_37 dim 1 : vector<4x384xf32>, i32 -> vector<4x384xf32>
    %83 = arith.addf %80, %82 : vector<4x384xf32>
    %84 = vector.extract_strided_slice %78 {offsets = [8, 0], sizes = [4, 384], strides = [1, 1]} : vector<36x384xf32> to vector<4x384xf32>
    %c17_i32_38 = arith.constant 17 : i32
    %85 = tpu.dynamic_rotate %84 by %c17_i32_38 dim 1 : vector<4x384xf32>, i32 -> vector<4x384xf32>
    %86 = arith.addf %83, %85 : vector<4x384xf32>
    %87 = vector.extract_strided_slice %78 {offsets = [12, 0], sizes = [4, 384], strides = [1, 1]} : vector<36x384xf32> to vector<4x384xf32>
    %c1_i32_39 = arith.constant 1 : i32
    %88 = tpu.dynamic_rotate %87 by %c1_i32_39 dim 1 : vector<4x384xf32>, i32 -> vector<4x384xf32>
    %89 = arith.addf %86, %88 : vector<4x384xf32>
    %90 = vector.extract_strided_slice %78 {offsets = [16, 0], sizes = [4, 384], strides = [1, 1]} : vector<36x384xf32> to vector<4x384xf32>
    %91 = arith.addf %89, %90 : vector<4x384xf32>
    %92 = vector.extract_strided_slice %78 {offsets = [20, 0], sizes = [4, 384], strides = [1, 1]} : vector<36x384xf32> to vector<4x384xf32>
    %c383_i32_40 = arith.constant 383 : i32
    %93 = tpu.dynamic_rotate %92 by %c383_i32_40 dim 1 : vector<4x384xf32>, i32 -> vector<4x384xf32>
    %94 = arith.addf %91, %93 : vector<4x384xf32>
    %95 = vector.extract_strided_slice %78 {offsets = [24, 0], sizes = [4, 384], strides = [1, 1]} : vector<36x384xf32> to vector<4x384xf32>
    %c367_i32_41 = arith.constant 367 : i32
    %96 = tpu.dynamic_rotate %95 by %c367_i32_41 dim 1 : vector<4x384xf32>, i32 -> vector<4x384xf32>
    %97 = arith.addf %94, %96 : vector<4x384xf32>
    %98 = vector.extract_strided_slice %78 {offsets = [28, 0], sizes = [4, 384], strides = [1, 1]} : vector<36x384xf32> to vector<4x384xf32>
    %c366_i32_42 = arith.constant 366 : i32
    %99 = tpu.dynamic_rotate %98 by %c366_i32_42 dim 1 : vector<4x384xf32>, i32 -> vector<4x384xf32>
    %100 = arith.addf %97, %99 : vector<4x384xf32>
    %101 = vector.extract_strided_slice %78 {offsets = [32, 0], sizes = [4, 384], strides = [1, 1]} : vector<36x384xf32> to vector<4x384xf32>
    %c365_i32_43 = arith.constant 365 : i32
    %102 = tpu.dynamic_rotate %101 by %c365_i32_43 dim 1 : vector<4x384xf32>, i32 -> vector<4x384xf32>
    %103 = arith.addf %100, %102 : vector<4x384xf32>
    %c0_44 = arith.constant 0 : index
    %c0_45 = arith.constant 0 : index
    %104 = vector.load %arg8[%c0_44, %c0_45] : memref<4x1xf32, #tpu.memory_space<vmem>>, vector<4x1xf32>
    %105 = vector.broadcast %104 : vector<4x1xf32> to vector<4x384xf32>
    %106 = arith.addf %103, %105 : vector<4x384xf32>
    %cst_46 = arith.constant 0.000000e+00 : f32
    %107 = vector.broadcast %cst_46 : f32 to vector<4x384xf32>
    %108 = arith.maximumf %106, %107 : vector<4x384xf32>
    %109 = vector.broadcast %0 : vector<1x384xf32> to vector<4x384xf32>
    %110 = arith.mulf %108, %109 : vector<4x384xf32>
    %c16 = arith.constant 16 : index
    %c0_47 = arith.constant 0 : index
    %111 = vector.load %arg12[%c16, %c0_47] : memref<20x384xf32, #tpu.memory_space<vmem>>, vector<4x384xf32>
    tpu.vector_store %arg12[%c16, %c0_47], %110 {strides = array<i32>} : memref<20x384xf32, #tpu.memory_space<vmem>>, vector<4x384xf32>,
    %c0_48 = arith.constant 0 : index
    %c0_49 = arith.constant 0 : index
    %112 = vector.load %arg9[%c0_48, %c0_49] : memref<8x20xf32, #tpu.memory_space<vmem>>, vector<8x20xf32>
    %c0_50 = arith.constant 0 : index
    %c0_51 = arith.constant 0 : index
    %113 = vector.load %arg12[%c0_50, %c0_51] : memref<20x384xf32, #tpu.memory_space<vmem>>, vector<20x384xf32>
    %cst_52 = arith.constant dense<0.000000e+00> : vector<8x384xf32>
    %114 = tpu.matmul %112, %113, %cst_52 {dimension_numbers = #tpu.dot_dimension_numbers<[1], [0], [0], [1], [0, 0, 1, 1], [], []>} : vector<8x20xf32>, vector<20x384xf32>, vector<8x384xf32> -> vector<8x384xf32>
    %c0_53 = arith.constant 0 : index
    %c0_54 = arith.constant 0 : index
    %115 = vector.load %arg10[%c0_53, %c0_54] : memref<8x1xf32, #tpu.memory_space<vmem>>, vector<8x1xf32>
    %116 = vector.broadcast %115 : vector<8x1xf32> to vector<8x384xf32>
    %117 = arith.addf %114, %116 : vector<8x384xf32>
    %118 = arith.addf %117, %2 : vector<8x384xf32>
    %c0_55 = arith.constant 0 : index
    %c0_56 = arith.constant 0 : index
    %c0_57 = arith.constant 0 : index
    %119 = vector.load %arg11[%c0_55, %c0_56, %c0_57] : memref<1x8x384xf32, #tpu.memory_space<vmem>>, vector<1x8x384xf32>
    %120 = vector.shape_cast %119 : vector<1x8x384xf32> to vector<8x384xf32>
    %121 = vector.shape_cast %118 : vector<8x384xf32> to vector<1x8x384xf32>
    tpu.vector_store %arg11[%c0_55, %c0_56, %c0_57], %121 {strides = array<i32>} : memref<1x8x384xf32, #tpu.memory_space<vmem>>, vector<1x8x384xf32>,
    return
  }
  func.func @transform_0(%arg0: i32) -> (i32, i32) {
    %c0_i32 = arith.constant 0 : i32
    %c0_i32_0 = arith.constant 0 : i32
    %c0_i32_1 = arith.constant 0 : i32
    return %c0_i32, %c0_i32_0 : i32, i32
  }
  func.func @transform_1(%arg0: i32) -> (i32, i32, i32) {
    %c0_i32 = arith.constant 0 : i32
    %c0_i32_0 = arith.constant 0 : i32
    %c0_i32_1 = arith.constant 0 : i32
    return %arg0, %c0_i32, %c0_i32_0 : i32, i32, i32
  }
  func.func @transform_2(%arg0: i32) -> (i32, i32) {
    %c0_i32 = arith.constant 0 : i32
    %c0_i32_0 = arith.constant 0 : i32
    %c0_i32_1 = arith.constant 0 : i32
    return %c0_i32, %c0_i32_0 : i32, i32
  }
  func.func @transform_3(%arg0: i32) -> (i32, i32) {
    %c0_i32 = arith.constant 0 : i32
    %c0_i32_0 = arith.constant 0 : i32
    %c0_i32_1 = arith.constant 0 : i32
    return %c0_i32, %c0_i32_0 : i32, i32
  }
  func.func @transform_4(%arg0: i32) -> (i32, i32) {
    %c0_i32 = arith.constant 0 : i32
    %c0_i32_0 = arith.constant 0 : i32
    %c0_i32_1 = arith.constant 0 : i32
    return %c0_i32, %c0_i32_0 : i32, i32
  }
  func.func @transform_5(%arg0: i32) -> (i32, i32) {
    %c0_i32 = arith.constant 0 : i32
    %c0_i32_0 = arith.constant 0 : i32
    %c0_i32_1 = arith.constant 0 : i32
    return %c0_i32, %c0_i32_0 : i32, i32
  }
  func.func @transform_6(%arg0: i32) -> (i32, i32) {
    %c0_i32 = arith.constant 0 : i32
    %c0_i32_0 = arith.constant 0 : i32
    %c0_i32_1 = arith.constant 0 : i32
    return %c0_i32, %c0_i32_0 : i32, i32
  }
  func.func @transform_7(%arg0: i32) -> (i32, i32) {
    %c0_i32 = arith.constant 0 : i32
    %c0_i32_0 = arith.constant 0 : i32
    %c0_i32_1 = arith.constant 0 : i32
    return %c0_i32, %c0_i32_0 : i32, i32
  }
  func.func @transform_8(%arg0: i32) -> (i32, i32) {
    %c0_i32 = arith.constant 0 : i32
    %c0_i32_0 = arith.constant 0 : i32
    %c0_i32_1 = arith.constant 0 : i32
    return %c0_i32, %c0_i32_0 : i32, i32
  }
  func.func @transform_9(%arg0: i32) -> (i32, i32) {
    %c0_i32 = arith.constant 0 : i32
    %c0_i32_0 = arith.constant 0 : i32
    %c0_i32_1 = arith.constant 0 : i32
    return %c0_i32, %c0_i32_0 : i32, i32
  }
  func.func @transform_10(%arg0: i32) -> (i32, i32, i32) {
    %c0_i32 = arith.constant 0 : i32
    %c0_i32_0 = arith.constant 0 : i32
    %c0_i32_1 = arith.constant 0 : i32
    return %arg0, %c0_i32, %c0_i32_0 : i32, i32, i32
  }
}

</mosaic_0001>

<llo_original>
// kernel: tpu_custom_call.1
$region0: #{tpu_custom_call.1}
  #allocation0 [shape = 'u32[]', space=smem, size = 0x4, offset = 0x4, fixed_abs, tag = 'smem constant byte address 0x4 - core index']
  #allocation1 [shape = 'u32[144,128]{1,0:T(1,128)}', space=vmem, size = 0x12000, scoped, tag = 'internal scratch']
  #allocation2 [shape = 'f32[20,384]{1,0:T(8,128)}', space=vmem, size = 0x9000, scoped, tag = 'scratch operand']
  %s0 = inlined_call_operand.vmem [shape: f32[1,384], index: 0, kind: input, shape index: {}]
  %s1 = inlined_call_operand.vmem [shape: f32[2,8,384], index: 1, kind: input, shape index: {}]
  %s2 = inlined_call_operand.vmem [shape: f32[36,8], index: 2, kind: input, shape index: {}]
  %s3 = inlined_call_operand.vmem [shape: f32[4,1], index: 3, kind: input, shape index: {}]
  %s4 = inlined_call_operand.vmem [shape: f32[36,12], index: 4, kind: input, shape index: {}]
  %s5 = inlined_call_operand.vmem [shape: f32[4,1], index: 5, kind: input, shape index: {}]
  %s6 = inlined_call_operand.vmem [shape: f32[36,16], index: 6, kind: input, shape index: {}]
  %s7 = inlined_call_operand.vmem [shape: f32[4,1], index: 7, kind: input, shape index: {}]
  %s8 = inlined_call_operand.vmem [shape: f32[8,20], index: 8, kind: input, shape index: {}]
  %s9 = inlined_call_operand.vmem [shape: f32[8,1], index: 9, kind: input, shape index: {}]
  %s10 = inlined_call_operand.hbm [shape: f32[2,8,384], index: 10, kind: output, shape index: {}]
  %s11 = sld [smem:[#allocation0]]
  $region73: #{tpu_custom_call.1} parent=0
    _
  %s13 = ssub.s32 1, %s11
  %s14 = scalar_select 0, %s13, %s11
  $region1: #{tpu_custom_call.1} parent=0
    #allocation3 [shape = 'u8[24576]{0}', space=vmem, size = 0x6000, scoped, tag = 'output window, operand 0']
    #allocation4 [shape = 's32[2]{0}', space=sflag, size = 0x8, scoped, tag = 'scoped memory for tpu_custom_call.1']
    %15 = vsyncpa [#allocation4], 0
    %s16 = scalar_lea.sflag [#allocation4], 1
    %17 = vsyncpa %s16, 0
    loop: start=0, step=1, limit=4
    $region2: #{tpu_custom_call.1} parent=1 // loop_pre_header
      _
    $region3: #{tpu_custom_call.1} parent=1 // loop_header
      %s19 = sphi 0, %s23
      %p20 = scmp.ge.s32.totalorder %s19, 4
      %s27 = sphi 0, %s27
      %s29 = sphi 0, %s27
      %s30 = sphi 0, %s29
      %s44 = sphi 0, %s30
      %s50 = sphi 0, %s52
      %s53 = sphi 0, %s50
      %s54 = sphi 0, %s53
      %s70 = sphi 0, %s54
      %s74 = sphi 0, %s74
      %s76 = sphi 0, %s74
      %s77 = sphi 0, %s76
      %s91 = sphi 0, %s77
      %s95 = sphi 0, %s95
      %s97 = sphi 0, %s95
      %s98 = sphi 0, %s97
      %s112 = sphi 0, %s98
      %s116 = sphi 0, %s116
      %s118 = sphi 0, %s116
      %s119 = sphi 0, %s118
      %s133 = sphi 0, %s119
      %s137 = sphi 0, %s137
      %s139 = sphi 0, %s137
      %s140 = sphi 0, %s139
      %s154 = sphi 0, %s140
      %s158 = sphi 0, %s158
      %s160 = sphi 0, %s158
      %s161 = sphi 0, %s160
      %s175 = sphi 0, %s161
      %s179 = sphi 0, %s179
      %s181 = sphi 0, %s179
      %s182 = sphi 0, %s181
      %s196 = sphi 0, %s182
      %s200 = sphi 0, %s200
      %s202 = sphi 0, %s200
      %s203 = sphi 0, %s202
      %s217 = sphi 0, %s203
      %s221 = sphi 0, %s221
      %s223 = sphi 0, %s221
      %s224 = sphi 0, %s223
      %s238 = sphi 0, %s224
      %s244 = sphi 0, %s246
      %s247 = sphi 0, %s244
      %s248 = sphi 0, %s247
      %s264 = sphi 0, %s248
    $region4: #{tpu_custom_call.1} parent=1 // loop_header_branch
      %22 = sbr.rel (%p20) target = $region8
    $region5: #{tpu_custom_call.1} parent=1 // loop_body
      %s24 = ssub.s32 %s19, 1
      %s25 = ssub.s32 %s19, 2
      %s26 = sadd.s32 %s19, 1
      %s28 = sadd.s32 %s27, 1
      %p31 = scmp.eq.s32.totalorder %s19, 1
      %p32 = scmp.ne.s32.totalorder %s27, %s29
      %p33 = scmp.eq.s32.totalorder %s19, 0
      %p34 = por %p32, %p33
      %p35 = scmp.ne.s32.totalorder %s27, %s29
      %p36 = scmp.eq.s32.totalorder %s24, 1
      %p37 = por %p35, %p36
      %p38 = scmp.ne.s32.totalorder %s29, %s30
      %p39 = scmp.eq.s32.totalorder %s24, 0
      %p40 = por %p38, %p39
      %p41 = scmp.ne.s32.totalorder %s29, %s30
      %p42 = scmp.eq.s32.totalorder %s25, 1
      %p43 = por %p41, %p42
      %p45 = scmp.ne.s32.totalorder %s30, %s44
      %p46 = scmp.eq.s32.totalorder %s25, 0
      %p47 = por %p45, %p46
      %s48 = ssub.s32 %s19, %s26
      %p49 = scmp.eq.s32.totalorder %s48, 0
      %s51 = sadd.s32 %s50, 1
      %s52 = scalar_select %p49, %s50, %s51
      %p55 = pneg %p49
      %p56 = scmp.eq.s32.totalorder %s19, 1
      %p57 = por %p55, %p56
      %p58 = scmp.ne.s32.totalorder %s50, %s53
      %p59 = scmp.eq.s32.totalorder %s19, 0
      %p60 = por %p58, %p59
      %p61 = scmp.ne.s32.totalorder %s50, %s53
      %p62 = scmp.eq.s32.totalorder %s24, 1
      %p63 = por %p61, %p62
      %p64 = scmp.ne.s32.totalorder %s53, %s54
      %p65 = scmp.eq.s32.totalorder %s24, 0
      %p66 = por %p64, %p65
      %p67 = scmp.ne.s32.totalorder %s53, %s54
      %p68 = scmp.eq.s32.totalorder %s25, 1
      %p69 = por %p67, %p68
      %p71 = scmp.ne.s32.totalorder %s54, %s70
      %p72 = scmp.eq.s32.totalorder %s25, 0
      %p73 = por %p71, %p72
      %s75 = sadd.s32 %s74, 1
      %p78 = scmp.eq.s32.totalorder %s19, 1
      %p79 = scmp.ne.s32.totalorder %s74, %s76
      %p80 = scmp.eq.s32.totalorder %s19, 0
      %p81 = por %p79, %p80
      %p82 = scmp.ne.s32.totalorder %s74, %s76
      %p83 = scmp.eq.s32.totalorder %s24, 1
      %p84 = por %p82, %p83
      %p85 = scmp.ne.s32.totalorder %s76, %s77
      %p86 = scmp.eq.s32.totalorder %s24, 0
      %p87 = por %p85, %p86
      %p88 = scmp.ne.s32.totalorder %s76, %s77
      %p89 = scmp.eq.s32.totalorder %s25, 1
      %p90 = por %p88, %p89
      %p92 = scmp.ne.s32.totalorder %s77, %s91
      %p93 = scmp.eq.s32.totalorder %s25, 0
      %p94 = por %p92, %p93
      %s96 = sadd.s32 %s95, 1
      %p99 = scmp.eq.s32.totalorder %s19, 1
      %p100 = scmp.ne.s32.totalorder %s95, %s97
      %p101 = scmp.eq.s32.totalorder %s19, 0
      %p102 = por %p100, %p101
      %p103 = scmp.ne.s32.totalorder %s95, %s97
      %p104 = scmp.eq.s32.totalorder %s24, 1
      %p105 = por %p103, %p104
      %p106 = scmp.ne.s32.totalorder %s97, %s98
      %p107 = scmp.eq.s32.totalorder %s24, 0
      %p108 = por %p106, %p107
      %p109 = scmp.ne.s32.totalorder %s97, %s98
      %p110 = scmp.eq.s32.totalorder %s25, 1
      %p111 = por %p109, %p110
      %p113 = scmp.ne.s32.totalorder %s98, %s112
      %p114 = scmp.eq.s32.totalorder %s25, 0
      %p115 = por %p113, %p114
      %s117 = sadd.s32 %s116, 1
      %p120 = scmp.eq.s32.totalorder %s19, 1
      %p121 = scmp.ne.s32.totalorder %s116, %s118
      %p122 = scmp.eq.s32.totalorder %s19, 0
      %p123 = por %p121, %p122
      %p124 = scmp.ne.s32.totalorder %s116, %s118
      %p125 = scmp.eq.s32.totalorder %s24, 1
      %p126 = por %p124, %p125
      %p127 = scmp.ne.s32.totalorder %s118, %s119
      %p128 = scmp.eq.s32.totalorder %s24, 0
      %p129 = por %p127, %p128
      %p130 = scmp.ne.s32.totalorder %s118, %s119
      %p131 = scmp.eq.s32.totalorder %s25, 1
      %p132 = por %p130, %p131
      %p134 = scmp.ne.s32.totalorder %s119, %s133
      %p135 = scmp.eq.s32.totalorder %s25, 0
      %p136 = por %p134, %p135
      %s138 = sadd.s32 %s137, 1
      %p141 = scmp.eq.s32.totalorder %s19, 1
      %p142 = scmp.ne.s32.totalorder %s137, %s139
      %p143 = scmp.eq.s32.totalorder %s19, 0
      %p144 = por %p142, %p143
      %p145 = scmp.ne.s32.totalorder %s137, %s139
      %p146 = scmp.eq.s32.totalorder %s24, 1
      %p147 = por %p145, %p146
      %p148 = scmp.ne.s32.totalorder %s139, %s140
      %p149 = scmp.eq.s32.totalorder %s24, 0
      %p150 = por %p148, %p149
      %p151 = scmp.ne.s32.totalorder %s139, %s140
      %p152 = scmp.eq.s32.totalorder %s25, 1
      %p153 = por %p151, %p152
      %p155 = scmp.ne.s32.totalorder %s140, %s154
      %p156 = scmp.eq.s32.totalorder %s25, 0
      %p157 = por %p155, %p156
      %s159 = sadd.s32 %s158, 1
      %p162 = scmp.eq.s32.totalorder %s19, 1
      %p163 = scmp.ne.s32.totalorder %s158, %s160
      %p164 = scmp.eq.s32.totalorder %s19, 0
      %p165 = por %p163, %p164
      %p166 = scmp.ne.s32.totalorder %s158, %s160
      %p167 = scmp.eq.s32.totalorder %s24, 1
      %p168 = por %p166, %p167
      %p169 = scmp.ne.s32.totalorder %s160, %s161
      %p170 = scmp.eq.s32.totalorder %s24, 0
      %p171 = por %p169, %p170
      %p172 = scmp.ne.s32.totalorder %s160, %s161
      %p173 = scmp.eq.s32.totalorder %s25, 1
      %p174 = por %p172, %p173
      %p176 = scmp.ne.s32.totalorder %s161, %s175
      %p177 = scmp.eq.s32.totalorder %s25, 0
      %p178 = por %p176, %p177
      %s180 = sadd.s32 %s179, 1
      %p183 = scmp.eq.s32.totalorder %s19, 1
      %p184 = scmp.ne.s32.totalorder %s179, %s181
      %p185 = scmp.eq.s32.totalorder %s19, 0
      %p186 = por %p184, %p185
      %p187 = scmp.ne.s32.totalorder %s179, %s181
      %p188 = scmp.eq.s32.totalorder %s24, 1
      %p189 = por %p187, %p188
      %p190 = scmp.ne.s32.totalorder %s181, %s182
      %p191 = scmp.eq.s32.totalorder %s24, 0
      %p192 = por %p190, %p191
      %p193 = scmp.ne.s32.totalorder %s181, %s182
      %p194 = scmp.eq.s32.totalorder %s25, 1
      %p195 = por %p193, %p194
      %p197 = scmp.ne.s32.totalorder %s182, %s196
      %p198 = scmp.eq.s32.totalorder %s25, 0
      %p199 = por %p197, %p198
      %s201 = sadd.s32 %s200, 1
      %p204 = scmp.eq.s32.totalorder %s19, 1
      %p205 = scmp.ne.s32.totalorder %s200, %s202
      %p206 = scmp.eq.s32.totalorder %s19, 0
      %p207 = por %p205, %p206
      %p208 = scmp.ne.s32.totalorder %s200, %s202
      %p209 = scmp.eq.s32.totalorder %s24, 1
      %p210 = por %p208, %p209
      %p211 = scmp.ne.s32.totalorder %s202, %s203
      %p212 = scmp.eq.s32.totalorder %s24, 0
      %p213 = por %p211, %p212
      %p214 = scmp.ne.s32.totalorder %s202, %s203
      %p215 = scmp.eq.s32.totalorder %s25, 1
      %p216 = por %p214, %p215
      %p218 = scmp.ne.s32.totalorder %s203, %s217
      %p219 = scmp.eq.s32.totalorder %s25, 0
      %p220 = por %p218, %p219
      %s222 = sadd.s32 %s221, 1
      %p225 = scmp.eq.s32.totalorder %s19, 1
      %p226 = scmp.ne.s32.totalorder %s221, %s223
      %p227 = scmp.eq.s32.totalorder %s19, 0
      %p228 = por %p226, %p227
      %p229 = scmp.ne.s32.totalorder %s221, %s223
      %p230 = scmp.eq.s32.totalorder %s24, 1
      %p231 = por %p229, %p230
      %p232 = scmp.ne.s32.totalorder %s223, %s224
      %p233 = scmp.eq.s32.totalorder %s24, 0
      %p234 = por %p232, %p233
      %p235 = scmp.ne.s32.totalorder %s223, %s224
      %p236 = scmp.eq.s32.totalorder %s25, 1
      %p237 = por %p235, %p236
      %p239 = scmp.ne.s32.totalorder %s224, %s238
      %p240 = scmp.eq.s32.totalorder %s25, 0
      %p241 = por %p239, %p240
      %s242 = ssub.s32 %s19, %s26
      %p243 = scmp.eq.s32.totalorder %s242, 0
      %s245 = sadd.s32 %s244, 1
      %s246 = scalar_select %p243, %s244, %s245
      %p249 = pneg %p243
      %p250 = scmp.eq.s32.totalorder %s19, 1
      %p251 = por %p249, %p250
      %p252 = scmp.ne.s32.totalorder %s244, %s247
      %p253 = scmp.eq.s32.totalorder %s19, 0
      %p254 = por %p252, %p253
      %p255 = scmp.ne.s32.totalorder %s244, %s247
      %p256 = scmp.eq.s32.totalorder %s24, 1
      %p257 = por %p255, %p256
      %p258 = scmp.ne.s32.totalorder %s247, %s248
      %p259 = scmp.eq.s32.totalorder %s24, 0
      %p260 = por %p258, %p259
      %p261 = scmp.ne.s32.totalorder %s247, %s248
      %p262 = scmp.eq.s32.totalorder %s25, 1
      %p263 = por %p261, %p262
      %p265 = scmp.ne.s32.totalorder %s248, %s264
      %p266 = scmp.eq.s32.totalorder %s25, 0
      %p267 = por %p265, %p266
      %p268 = scmp.le.s32.totalorder 1, %s19
      %p269 = scmp.lt.s32.totalorder %s19, 3
      %p270 = pnand %p268, %p269
      %p271 = pneg %p270
      // Predicated region
      $region9: #{tpu_custom_call.1} parent=5 // pred_check
        _
      $region10: #{tpu_custom_call.1} parent=5 // pred_check_branch
        %273 = sbr.rel (%p270) target = $region12
      $region11: #{tpu_custom_call.1} parent=5 // pred_region
        %s274 = ssub.s32 %s19, 1
        // Predicated region
        $region13: #{tpu_custom_call.1} parent=11 // pred_check
          %p275 = pneg %p40
        $region14: #{tpu_custom_call.1} parent=11 // pred_check_branch
          %277 = sbr.rel (%p275) target = $region16
        $region15: #{tpu_custom_call.1} parent=11 // pred_region
          _
        $region16: #{tpu_custom_call.1} parent=11 // pred_fallthru
          _
        // Predicated region
        $region17: #{tpu_custom_call.1} parent=11 // pred_check
          %p278 = pneg %p87
        $region18: #{tpu_custom_call.1} parent=11 // pred_check_branch
          %280 = sbr.rel (%p278) target = $region20
        $region19: #{tpu_custom_call.1} parent=11 // pred_region
          _
        $region20: #{tpu_custom_call.1} parent=11 // pred_fallthru
          _
        // Predicated region
        $region21: #{tpu_custom_call.1} parent=11 // pred_check
          %p281 = pneg %p108
        $region22: #{tpu_custom_call.1} parent=11 // pred_check_branch
          %283 = sbr.rel (%p281) target = $region24
        $region23: #{tpu_custom_call.1} parent=11 // pred_region
          _
        $region24: #{tpu_custom_call.1} parent=11 // pred_fallthru
          _
        // Predicated region
        $region25: #{tpu_custom_call.1} parent=11 // pred_check
          %p284 = pneg %p129
        $region26: #{tpu_custom_call.1} parent=11 // pred_check_branch
          %286 = sbr.rel (%p284) target = $region28
        $region27: #{tpu_custom_call.1} parent=11 // pred_region
          _
        $region28: #{tpu_custom_call.1} parent=11 // pred_fallthru
          _
        // Predicated region
        $region29: #{tpu_custom_call.1} parent=11 // pred_check
          %p287 = pneg %p150
        $region30: #{tpu_custom_call.1} parent=11 // pred_check_branch
          %289 = sbr.rel (%p287) target = $region32
        $region31: #{tpu_custom_call.1} parent=11 // pred_region
          _
        $region32: #{tpu_custom_call.1} parent=11 // pred_fallthru
          _
        // Predicated region
        $region33: #{tpu_custom_call.1} parent=11 // pred_check
          %p290 = pneg %p171
        $region34: #{tpu_custom_call.1} parent=11 // pred_check_branch
          %292 = sbr.rel (%p290) target = $region36
        $region35: #{tpu_custom_call.1} parent=11 // pred_region
          _
        $region36: #{tpu_custom_call.1} parent=11 // pred_fallthru
          _
        // Predicated region
        $region37: #{tpu_custom_call.1} parent=11 // pred_check
          %p293 = pneg %p192
        $region38: #{tpu_custom_call.1} parent=11 // pred_check_branch
          %295 = sbr.rel (%p293) target = $region40
        $region39: #{tpu_custom_call.1} parent=11 // pred_region
          _
        $region40: #{tpu_custom_call.1} parent=11 // pred_fallthru
          _
        // Predicated region
        $region41: #{tpu_custom_call.1} parent=11 // pred_check
          %p296 = pneg %p213
        $region42: #{tpu_custom_call.1} parent=11 // pred_check_branch
          %298 = sbr.rel (%p296) target = $region44
        $region43: #{tpu_custom_call.1} parent=11 // pred_region
          _
        $region44: #{tpu_custom_call.1} parent=11 // pred_fallthru
          _
        // Predicated region
        $region45: #{tpu_custom_call.1} parent=11 // pred_check
          %p299 = pneg %p234
        $region46: #{tpu_custom_call.1} parent=11 // pred_check_branch
          %301 = sbr.rel (%p299) target = $region48
        $region47: #{tpu_custom_call.1} parent=11 // pred_region
          _
        $region48: #{tpu_custom_call.1} parent=11 // pred_fallthru
          _
      $region12: #{tpu_custom_call.1} parent=5 // pred_fallthru
        _
      %p302 = scmp.lt.s32.totalorder %s19, 2
      // Predicated region
      $region49: #{tpu_custom_call.1} parent=5 // pred_check
        %p303 = pneg %p302
      $region50: #{tpu_custom_call.1} parent=5 // pred_check_branch
        %305 = sbr.rel (%p303) target = $region52
      $region51: #{tpu_custom_call.1} parent=5 // pred_region
        // Predicated region
        $region53: #{tpu_custom_call.1} parent=51 // pred_check
          %p306 = pneg %p60
        $region54: #{tpu_custom_call.1} parent=51 // pred_check_branch
          %308 = sbr.rel (%p306) target = $region56
        $region55: #{tpu_custom_call.1} parent=51 // pred_region
          %p309 = scmp.lt.s32.totalorder %s19, 1
          %s310 = scalar_select %p309, %s19, 1
          %s311 = smul.addr %s310, 3
          %s312 = smul.addr %s311, 8
          %s313 = scalar_lea.vmem %s1, %s312
        $region56: #{tpu_custom_call.1} parent=51 // pred_fallthru
          _
      $region52: #{tpu_custom_call.1} parent=5 // pred_fallthru
        _
      %p314 = scmp.le.s32.totalorder 1, %s19
      %p315 = scmp.lt.s32.totalorder %s19, 3
      %p316 = pnand %p314, %p315
      %p317 = pneg %p316
      // Predicated region
      $region57: #{tpu_custom_call.1} parent=5 // pred_check
        _
      $region58: #{tpu_custom_call.1} parent=5 // pred_check_branch
        %319 = sbr.rel (%p316) target = $region60
      $region59: #{tpu_custom_call.1} parent=5 // pred_region
        %s320 = ssub.s32 %s19, 1
        %p321 = pneg %p40
        %p322 = pneg %p37
        %p323 = scmp.lt.s32.totalorder %s24, 1
        %s324 = scalar_select %p323, %s24, 1
        %s325 = smul.addr %s324, 3
        %s326 = smul.addr %s325, 8
        %s327 = scalar_lea.vmem %s1, %s326
        %p328 = pneg %p66
        %p329 = pneg %p63
        %p330 = pneg %p87
        %p331 = pneg %p84
        %p332 = pneg %p108
        %p333 = pneg %p105
        %p334 = pneg %p129
        %p335 = pneg %p126
        %p336 = pneg %p150
        %p337 = pneg %p147
        %p338 = pneg %p171
        %p339 = pneg %p168
        %p340 = pneg %p192
        %p341 = pneg %p189
        %p342 = pneg %p213
        %p343 = pneg %p210
        %p344 = pneg %p234
        %p345 = pneg %p231
        %p346 = pneg %p260
        %p347 = pneg %p257
        %s348 = sand.u32 %s247, 1
        %s349 = scalar_lea.sflag [#allocation4], %s348
        %s350 = sand.u32 %s247, 1
        %s351 = smul.addr %s350, 24
        %s352 = scalar_lea.vmem [#allocation3], %s351
        %p353 = scmp.lt.s32.totalorder %s24, 1
        %s354 = scalar_select %p353, %s24, 1
        %s355 = smul.addr %s354, 3
        %s356 = smul.addr %s355, 8
        %s357 = scalar_lea.vmem %s1, %s356
        %v358 = vld [vmem:[%s0] sm:$0x7]
        %v359 = vld [vmem:[%s357] sm:$0xff]
        %v360 = vld [vmem:[%s357 + $0x8] sm:$0xff]
        %v361 = vld [vmem:[%s357 + $0x10] sm:$0xff]
        %362 = vst [vmem:[#allocation2] sm:$0xff] %v359
        %363 = vst [vmem:[#allocation2 + $0x8] sm:$0xff] %v360
        %364 = vst [vmem:[#allocation2 + $0x10] sm:$0xff] %v361
        %v365 = vld [vmem:[%s2] sm:$0xff]
        %v366 = vld [vmem:[%s2 + $0x8] sm:$0xff]
        %v367 = vld [vmem:[%s2 + $0x10] sm:$0xff]
        %v368 = vld [vmem:[%s2 + $0x18] sm:$0xff]
        %v369 = vld [vmem:[%s2 + $0x20] sm:$0xf]
        %v370 = vld [vmem:[#allocation2] sm:$0xff]
        %v371 = vld [vmem:[#allocation2 + $0x8] sm:$0xff]
        %v372 = vld [vmem:[#allocation2 + $0x10] sm:$0xff]
        %vm373 = vcmask 64512
        %v375 = vsel %vm373, %v365, 0
        %v378 = vsel %vm373, %v366, 0
        %v381 = vsel %vm373, %v367, 0
        %v384 = vsel %vm373, %v368, 0
        %v387 = vsel %vm373, %v369, 0
        %389 = vmatprep.subr.mxu0 %v371
        %390 = vmatpush1.msra.mxu0 %v370
        %391 = vmatprep.subr.mxu0 0.0
        %392 = vmatpush1.msra.mxu0 0.0
        %393 = vmatprep.subr.mxu0 0.0
        %394 = vmatpush1.msra.mxu0 0.0
        %395 = vmatprep.subr.mxu0 0.0
        %396 = vmatpush1.msra.mxu0 0.0
        %397 = vmatprep.subr.mxu0 0.0
        %398 = vmatpush1.msra.mxu0 0.0
        %399 = vmatprep.subr.mxu0 0.0
        %400 = vmatpush1.msra.mxu0 0.0
        %401 = vmatprep.subr.mxu0 0.0
        %402 = vmatpush1.msra.mxu0 0.0
        %403 = vmatprep.subr.mxu0 0.0
        %404 = vmatpush1.msra.mxu0 0.0
        %405 = vmatprep.subr.mxu0 0.0
        %406 = vmatpush1.msra.mxu0 0.0
        %407 = vmatprep.subr.mxu0 0.0
        %408 = vmatpush1.msra.mxu0 0.0
        %409 = vmatprep.subr.mxu0 0.0
        %410 = vmatpush1.msra.mxu0 0.0
        %411 = vmatprep.subr.mxu0 0.0
        %412 = vmatpush1.msra.mxu0 0.0
        %413 = vmatprep.subr.mxu0 0.0
        %414 = vmatpush1.msra.mxu0 0.0
        %415 = vmatprep.subr.mxu0 0.0
        %416 = vmatpush1.msra.mxu0 0.0
        %417 = vmatprep.subr.mxu0 0.0
        %418 = vmatpush1.msra.mxu0 0.0
        %419 = vmatprep.subr.mxu0 0.0
        %420 = vmatpush1.msra.mxu0 0.0
        %421 = vmatprep.subr.mxu0 0.0
        %422 = vmatpush1.msra.mxu0 0.0
        %423 = vmatprep.subr.mxu0 0.0
        %424 = vmatpush1.msra.mxu0 0.0
        %425 = vmatprep.subr.mxu0 0.0
        %426 = vmatpush1.msra.mxu0 0.0
        %427 = vmatprep.subr.mxu0 0.0
        %428 = vmatpush1.msra.mxu0 0.0
        %429 = vmatprep.subr.mxu0 0.0
        %430 = vmatpush1.msra.mxu0 0.0
        %431 = vmatprep.subr.mxu0 0.0
        %432 = vmatpush1.msra.mxu0 0.0
        %433 = vmatprep.subr.mxu0 0.0
        %434 = vmatpush1.msra.mxu0 0.0
        %435 = vmatprep.subr.mxu0 0.0
        %436 = vmatpush1.msra.mxu0 0.0
        %437 = vmatprep.subr.mxu0 0.0
        %438 = vmatpush1.msra.mxu0 0.0
        %439 = vmatprep.subr.mxu0 0.0
        %440 = vmatpush1.msra.mxu0 0.0
        %441 = vmatprep.subr.mxu0 0.0
        %442 = vmatpush1.msra.mxu0 0.0
        %443 = vmatprep.subr.mxu0 0.0
        %444 = vmatpush1.msra.mxu0 0.0
        %445 = vmatprep.subr.mxu0 0.0
        %446 = vmatpush1.msra.mxu0 0.0
        %447 = vmatprep.subr.mxu0 0.0
        %448 = vmatpush1.msra.mxu0 0.0
        %449 = vmatprep.subr.mxu0 0.0
        %450 = vmatpush1.msra.mxu0 0.0
        %451 = vmatprep.subr.mxu0 0.0
        %452 = vmatpush1.msra.mxu0 0.0
        %453 = vmatprep.mubr.f32.mxu0 0.0
        %454 = vmatmul.mubr.f32.gmra.mrb[0].mxu0 %v375
        %v455 = vpop.f32.mrb[0].mxu0
        %v456 = vadd.f32 0.0, %v455
        %v457 = vpop.f32.mrb[0].mxu0
        %v458 = vadd.f32 0.0, %v457
        %459 = vmatprep.mubr.f32.mxu0 0.0
        %460 = vmatmul.mubr.f32.gmra.mrb[0].mxu0 %v378
        %v461 = vpop.f32.mrb[0].mxu0
        %v462 = vadd.f32 0.0, %v461
        %v463 = vpop.f32.mrb[0].mxu0
        %v464 = vadd.f32 0.0, %v463
        %465 = vmatprep.mubr.f32.mxu0 0.0
        %466 = vmatmul.mubr.f32.gmra.mrb[0].mxu0 %v381
        %v467 = vpop.f32.mrb[0].mxu0
        %v468 = vadd.f32 0.0, %v467
        %v469 = vpop.f32.mrb[0].mxu0
        %v470 = vadd.f32 0.0, %v469
        %471 = vmatprep.mubr.f32.mxu0 0.0
        %472 = vmatmul.mubr.f32.gmra.mrb[0].mxu0 %v384
        %v473 = vpop.f32.mrb[0].mxu0
        %v474 = vadd.f32 0.0, %v473
        %v475 = vpop.f32.mrb[0].mxu0
        %v476 = vadd.f32 0.0, %v475
        %477 = vmatprep.mubr.f32.mxu0 0.0
        %478 = vmatmul.mubr.f32.gmra.mrb[0].mxu0 %v387
        %v479 = vpop.f32.mrb[0].mxu0
        %v480 = vadd.f32 0.0, %v479
        %v481 = vpop.f32.mrb[0].mxu0
        %v482 = vadd.f32 0.0, %v481
        %483 = vdwg.mxu0
        %484 = vmatprep.subr.mxu0 0.0
        %485 = vmatpush1.msra.mxu0 %v372
        %486 = vmatprep.subr.mxu0 0.0
        %487 = vmatpush1.msra.mxu0 0.0
        %488 = vmatprep.subr.mxu0 0.0
        %489 = vmatpush1.msra.mxu0 0.0
        %490 = vmatprep.subr.mxu0 0.0
        %491 = vmatpush1.msra.mxu0 0.0
        %492 = vmatprep.subr.mxu0 0.0
        %493 = vmatpush1.msra.mxu0 0.0
        %494 = vmatprep.subr.mxu0 0.0
        %495 = vmatpush1.msra.mxu0 0.0
        %496 = vmatprep.subr.mxu0 0.0
        %497 = vmatpush1.msra.mxu0 0.0
        %498 = vmatprep.subr.mxu0 0.0
        %499 = vmatpush1.msra.mxu0 0.0
        %500 = vmatprep.subr.mxu0 0.0
        %501 = vmatpush1.msra.mxu0 0.0
        %502 = vmatprep.subr.mxu0 0.0
        %503 = vmatpush1.msra.mxu0 0.0
        %504 = vmatprep.subr.mxu0 0.0
        %505 = vmatpush1.msra.mxu0 0.0
        %506 = vmatprep.subr.mxu0 0.0
        %507 = vmatpush1.msra.mxu0 0.0
        %508 = vmatprep.subr.mxu0 0.0
        %509 = vmatpush1.msra.mxu0 0.0
        %510 = vmatprep.subr.mxu0 0.0
        %511 = vmatpush1.msra.mxu0 0.0
        %512 = vmatprep.subr.mxu0 0.0
        %513 = vmatpush1.msra.mxu0 0.0
        %514 = vmatprep.subr.mxu0 0.0
        %515 = vmatpush1.msra.mxu0 0.0
        %516 = vmatprep.subr.mxu0 0.0
        %517 = vmatpush1.msra.mxu0 0.0
        %518 = vmatprep.subr.mxu0 0.0
        %519 = vmatpush1.msra.mxu0 0.0
        %520 = vmatprep.subr.mxu0 0.0
        %521 = vmatpush1.msra.mxu0 0.0
        %522 = vmatprep.subr.mxu0 0.0
        %523 = vmatpush1.msra.mxu0 0.0
        %524 = vmatprep.subr.mxu0 0.0
        %525 = vmatpush1.msra.mxu0 0.0
        %526 = vmatprep.subr.mxu0 0.0
        %527 = vmatpush1.msra.mxu0 0.0
        %528 = vmatprep.subr.mxu0 0.0
        %529 = vmatpush1.msra.mxu0 0.0
        %530 = vmatprep.subr.mxu0 0.0
        %531 = vmatpush1.msra.mxu0 0.0
        %532 = vmatprep.subr.mxu0 0.0
        %533 = vmatpush1.msra.mxu0 0.0
        %534 = vmatprep.subr.mxu0 0.0
        %535 = vmatpush1.msra.mxu0 0.0
        %536 = vmatprep.subr.mxu0 0.0
        %537 = vmatpush1.msra.mxu0 0.0
        %538 = vmatprep.subr.mxu0 0.0
        %539 = vmatpush1.msra.mxu0 0.0
        %540 = vmatprep.subr.mxu0 0.0
        %541 = vmatpush1.msra.mxu0 0.0
        %542 = vmatprep.subr.mxu0 0.0
        %543 = vmatpush1.msra.mxu0 0.0
        %544 = vmatprep.subr.mxu0 0.0
        %545 = vmatpush1.msra.mxu0 0.0
        %546 = vmatprep.subr.mxu0 0.0
        %547 = vmatpush1.msra.mxu0 0.0
        %548 = vmatprep.mubr.f32.mxu0 0.0
        %549 = vmatmul.mubr.f32.gmra.mrb[0].mxu0 %v375
        %v550 = vpop.f32.mrb[0].mxu0
        %v551 = vadd.f32 0.0, %v550
        %v552 = vpop.f32.mrb[0].mxu0
        %553 = vmatprep.mubr.f32.mxu0 0.0
        %554 = vmatmul.mubr.f32.gmra.mrb[0].mxu0 %v378
        %v555 = vpop.f32.mrb[0].mxu0
        %v556 = vadd.f32 0.0, %v555
        %v557 = vpop.f32.mrb[0].mxu0
        %558 = vmatprep.mubr.f32.mxu0 0.0
        %559 = vmatmul.mubr.f32.gmra.mrb[0].mxu0 %v381
        %v560 = vpop.f32.mrb[0].mxu0
        %v561 = vadd.f32 0.0, %v560
        %v562 = vpop.f32.mrb[0].mxu0
        %563 = vmatprep.mubr.f32.mxu0 0.0
        %564 = vmatmul.mubr.f32.gmra.mrb[0].mxu0 %v384
        %v565 = vpop.f32.mrb[0].mxu0
        %v566 = vadd.f32 0.0, %v565
        %v567 = vpop.f32.mrb[0].mxu0
        %568 = vmatprep.mubr.f32.mxu0 0.0
        %569 = vmatmul.mubr.f32.gmra.mrb[0].mxu0 %v387
        %v570 = vpop.f32.mrb[0].mxu0
        %v571 = vadd.f32 0.0, %v570
        %v572 = vpop.f32.mrb[0].mxu0
        %573 = vdwg.mxu0
        %574 = vrot.lane.b32.xlu0 %v456, 19
        %v575 = vpop.permute.xlu0 %574
        %576 = vrot.lane.b32.xlu0 %v458, 19
        %v577 = vpop.permute.xlu0 %576
        %578 = vrot.lane.b32.xlu0 %v551, 19
        %v579 = vpop.permute.xlu0 %578
        %v580 = vlaneseq
        %v581 = vand.u32 %v580, 127
        %vm582 = vcmp.lt.s32.totalorder %v581, 19
        %v583 = vsel %vm582, %v577, %v579
        %v584 = vsel %vm582, %v575, %v577
        %v585 = vsel %vm582, %v579, %v575
        %v589 = vrot.slane %v456, 4
        %v590 = vrot.slane %v458, 4
        %v591 = vrot.slane %v551, 4
        %595 = vrot.lane.b32.xlu0 %v589, 18
        %v596 = vpop.permute.xlu0 %595
        %597 = vrot.lane.b32.xlu0 %v590, 18
        %v598 = vpop.permute.xlu0 %597
        %599 = vrot.lane.b32.xlu0 %v591, 18
        %v600 = vpop.permute.xlu0 %599
        %vm601 = vcmp.lt.s32.totalorder %v581, 18
        %v602 = vsel %vm601, %v598, %v600
        %v603 = vsel %vm601, %v596, %v598
        %v604 = vsel %vm601, %v600, %v596
        %v605 = vadd.f32 %v585, %v604
        %v606 = vadd.f32 %v584, %v603
        %v607 = vadd.f32 %v583, %v602
        %608 = vrot.lane.b32.xlu0 %v462, 17
        %v609 = vpop.permute.xlu0 %608
        %610 = vrot.lane.b32.xlu0 %v464, 17
        %v611 = vpop.permute.xlu0 %610
        %612 = vrot.lane.b32.xlu0 %v556, 17
        %v613 = vpop.permute.xlu0 %612
        %vm614 = vcmp.lt.s32.totalorder %v581, 17
        %v615 = vsel %vm614, %v611, %v613
        %v616 = vsel %vm614, %v609, %v611
        %v617 = vsel %vm614, %v613, %v609
        %v618 = vadd.f32 %v605, %v617
        %v619 = vadd.f32 %v606, %v616
        %v620 = vadd.f32 %v607, %v615
        %v624 = vrot.slane %v462, 4
        %v625 = vrot.slane %v464, 4
        %v626 = vrot.slane %v556, 4
        %630 = vrot.lane.b32.xlu0 %v624, 1
        %v631 = vpop.permute.xlu0 %630
        %632 = vrot.lane.b32.xlu0 %v625, 1
        %v633 = vpop.permute.xlu0 %632
        %634 = vrot.lane.b32.xlu0 %v626, 1
        %v635 = vpop.permute.xlu0 %634
        %vm636 = vcmp.lt.s32.totalorder %v581, 1
        %v637 = vsel %vm636, %v633, %v635
        %v638 = vsel %vm636, %v631, %v633
        %v639 = vsel %vm636, %v635, %v631
        %v640 = vadd.f32 %v618, %v639
        %v641 = vadd.f32 %v619, %v638
        %v642 = vadd.f32 %v620, %v637
        %v643 = vadd.f32 %v640, %v468
        %v644 = vadd.f32 %v641, %v470
        %v645 = vadd.f32 %v642, %v561
        %v649 = vrot.slane %v468, 4
        %v650 = vrot.slane %v470, 4
        %v651 = vrot.slane %v561, 4
        %655 = vrot.lane.b32.xlu0 %v649, 127
        %v656 = vpop.permute.xlu0 %655
        %657 = vrot.lane.b32.xlu0 %v650, 127
        %v658 = vpop.permute.xlu0 %657
        %659 = vrot.lane.b32.xlu0 %v651, 127
        %v660 = vpop.permute.xlu0 %659
        %vm661 = vcmp.lt.s32.totalorder %v581, 127
        %v662 = vsel %vm661, %v658, %v660
        %v663 = vsel %vm661, %v656, %v658
        %v664 = vsel %vm661, %v660, %v656
        %v665 = vadd.f32 %v643, %v663
        %v666 = vadd.f32 %v644, %v662
        %v667 = vadd.f32 %v645, %v664
        %668 = vrot.lane.b32.xlu0 %v474, 111
        %v669 = vpop.permute.xlu0 %668
        %670 = vrot.lane.b32.xlu0 %v476, 111
        %v671 = vpop.permute.xlu0 %670
        %672 = vrot.lane.b32.xlu0 %v566, 111
        %v673 = vpop.permute.xlu0 %672
        %vm674 = vcmp.lt.s32.totalorder %v581, 111
        %v675 = vsel %vm674, %v671, %v673
        %v676 = vsel %vm674, %v669, %v671
        %v677 = vsel %vm674, %v673, %v669
        %v678 = vadd.f32 %v665, %v676
        %v679 = vadd.f32 %v666, %v675
        %v680 = vadd.f32 %v667, %v677
        %v684 = vrot.slane %v474, 4
        %v685 = vrot.slane %v476, 4
        %v686 = vrot.slane %v566, 4
        %690 = vrot.lane.b32.xlu0 %v684, 110
        %v691 = vpop.permute.xlu0 %690
        %692 = vrot.lane.b32.xlu0 %v685, 110
        %v693 = vpop.permute.xlu0 %692
        %694 = vrot.lane.b32.xlu0 %v686, 110
        %v695 = vpop.permute.xlu0 %694
        %vm696 = vcmp.lt.s32.totalorder %v581, 110
        %v697 = vsel %vm696, %v693, %v695
        %v698 = vsel %vm696, %v691, %v693
        %v699 = vsel %vm696, %v695, %v691
        %v700 = vadd.f32 %v678, %v698
        %v701 = vadd.f32 %v679, %v697
        %v702 = vadd.f32 %v680, %v699
        %703 = vrot.lane.b32.xlu0 %v480, 109
        %v704 = vpop.permute.xlu0 %703
        %705 = vrot.lane.b32.xlu0 %v482, 109
        %v706 = vpop.permute.xlu0 %705
        %707 = vrot.lane.b32.xlu0 %v571, 109
        %v708 = vpop.permute.xlu0 %707
        %vm709 = vcmp.lt.s32.totalorder %v581, 109
        %v710 = vsel %vm709, %v706, %v708
        %v711 = vsel %vm709, %v704, %v706
        %v712 = vsel %vm709, %v708, %v704
        %v713 = vadd.f32 %v700, %v711
        %v714 = vadd.f32 %v701, %v710
        %v715 = vadd.f32 %v702, %v712
        %v716 = vld [vmem:[%s3] sm:$0xf]
        %718 = vset.pattern.permute.xlu0 0
        %719 = vperm.xlu0 %718, %v716
        %v720 = vpop.permute.xlu0 %719
        %v722 = vadd.f32 %v713, %v720
        %v723 = vadd.f32 %v714, %v720
        %v724 = vadd.f32 %v715, %v720
        %v725 = vmax.f32 %v722, 0.0
        %v726 = vmax.f32 %v723, 0.0
        %v727 = vmax.f32 %v724, 0.0
        %v729 = vlaneseq
        %v730 = vshrl.u32 %v729, 7
        %v731 = vsub.s32 0, %v730
        %v732 = vrot.slane %v358, %v731
        %v733 = vlaneseq
        %v734 = vshrl.u32 %v733, 7
        %v735 = vsub.s32 1, %v734
        %v736 = vrot.slane %v358, %v735
        %v737 = vlaneseq
        %v738 = vshrl.u32 %v737, 7
        %v739 = vsub.s32 2, %v738
        %v740 = vrot.slane %v358, %v739
        %v744 = vmul.f32 %v725, %v732
        %v745 = vmul.f32 %v726, %v736
        %v746 = vmul.f32 %v727, %v740
        %747 = vst [vmem:[#allocation2 + $0x18] sm:$0xf] %v744
        %748 = vst [vmem:[#allocation2 + $0x20] sm:$0xf] %v745
        %749 = vst [vmem:[#allocation2 + $0x28] sm:$0xf] %v746
        %v750 = vld [vmem:[%s4] sm:$0xff]
        %v751 = vld [vmem:[%s4 + $0x8] sm:$0xff]
        %v752 = vld [vmem:[%s4 + $0x10] sm:$0xff]
        %v753 = vld [vmem:[%s4 + $0x18] sm:$0xff]
        %v754 = vld [vmem:[%s4 + $0x20] sm:$0xf]
        %v755 = vld [vmem:[#allocation2] sm:$0xff]
        %v756 = vld [vmem:[#allocation2 + $0x8] sm:$0xff]
        %v757 = vld [vmem:[#allocation2 + $0x10] sm:$0xff]
        %v758 = vld [vmem:[#allocation2 + $0x18] sm:$0xf]
        %v759 = vld [vmem:[#allocation2 + $0x20] sm:$0xf]
        %v760 = vld [vmem:[#allocation2 + $0x28] sm:$0xf]
        %vm761 = vcmask 97280
        %v763 = vsel %vm761, %v750, 0
        %v766 = vsel %vm761, %v751, 0
        %v769 = vsel %vm761, %v752, 0
        %v772 = vsel %vm761, %v753, 0
        %v775 = vsel %vm761, %v754, 0
        %vm777 = vcmask 1043456
        %v779 = vsel %vm777, %v758, 0
        %v782 = vsel %vm777, %v759, 0
        %v785 = vsel %vm777, %v760, 0
        %787 = vmatprep.subr.mxu0 %v756
        %788 = vmatpush1.msra.mxu0 %v755
        %789 = vmatprep.subr.mxu0 %v782
        %790 = vmatpush1.msra.mxu0 %v779
        %791 = vmatprep.subr.mxu0 0.0
        %792 = vmatpush1.msra.mxu0 0.0
        %793 = vmatprep.subr.mxu0 0.0
        %794 = vmatpush1.msra.mxu0 0.0
        %795 = vmatprep.subr.mxu0 0.0
        %796 = vmatpush1.msra.mxu0 0.0
        %797 = vmatprep.subr.mxu0 0.0
        %798 = vmatpush1.msra.mxu0 0.0
        %799 = vmatprep.subr.mxu0 0.0
        %800 = vmatpush1.msra.mxu0 0.0
        %801 = vmatprep.subr.mxu0 0.0
        %802 = vmatpush1.msra.mxu0 0.0
        %803 = vmatprep.subr.mxu0 0.0
        %804 = vmatpush1.msra.mxu0 0.0
        %805 = vmatprep.subr.mxu0 0.0
        %806 = vmatpush1.msra.mxu0 0.0
        %807 = vmatprep.subr.mxu0 0.0
        %808 = vmatpush1.msra.mxu0 0.0
        %809 = vmatprep.subr.mxu0 0.0
        %810 = vmatpush1.msra.mxu0 0.0
        %811 = vmatprep.subr.mxu0 0.0
        %812 = vmatpush1.msra.mxu0 0.0
        %813 = vmatprep.subr.mxu0 0.0
        %814 = vmatpush1.msra.mxu0 0.0
        %815 = vmatprep.subr.mxu0 0.0
        %816 = vmatpush1.msra.mxu0 0.0
        %817 = vmatprep.subr.mxu0 0.0
        %818 = vmatpush1.msra.mxu0 0.0
        %819 = vmatprep.subr.mxu0 0.0
        %820 = vmatpush1.msra.mxu0 0.0
        %821 = vmatprep.subr.mxu0 0.0
        %822 = vmatpush1.msra.mxu0 0.0
        %823 = vmatprep.subr.mxu0 0.0
        %824 = vmatpush1.msra.mxu0 0.0
        %825 = vmatprep.subr.mxu0 0.0
        %826 = vmatpush1.msra.mxu0 0.0
        %827 = vmatprep.subr.mxu0 0.0
        %828 = vmatpush1.msra.mxu0 0.0
        %829 = vmatprep.subr.mxu0 0.0
        %830 = vmatpush1.msra.mxu0 0.0
        %831 = vmatprep.subr.mxu0 0.0
        %832 = vmatpush1.msra.mxu0 0.0
        %833 = vmatprep.subr.mxu0 0.0
        %834 = vmatpush1.msra.mxu0 0.0
        %835 = vmatprep.subr.mxu0 0.0
        %836 = vmatpush1.msra.mxu0 0.0
        %837 = vmatprep.subr.mxu0 0.0
        %838 = vmatpush1.msra.mxu0 0.0
        %839 = vmatprep.subr.mxu0 0.0
        %840 = vmatpush1.msra.mxu0 0.0
        %841 = vmatprep.subr.mxu0 0.0
        %842 = vmatpush1.msra.mxu0 0.0
        %843 = vmatprep.subr.mxu0 0.0
        %844 = vmatpush1.msra.mxu0 0.0
        %845 = vmatprep.subr.mxu0 0.0
        %846 = vmatpush1.msra.mxu0 0.0
        %847 = vmatprep.subr.mxu0 0.0
        %848 = vmatpush1.msra.mxu0 0.0
        %849 = vmatprep.subr.mxu0 0.0
        %850 = vmatpush1.msra.mxu0 0.0
        %851 = vmatprep.mubr.f32.mxu0 0.0
        %852 = vmatmul.mubr.f32.gmra.mrb[0].mxu0 %v763
        %v853 = vpop.f32.mrb[0].mxu0
        %v854 = vadd.f32 0.0, %v853
        %v855 = vpop.f32.mrb[0].mxu0
        %v856 = vadd.f32 0.0, %v855
        %857 = vmatprep.mubr.f32.mxu0 0.0
        %858 = vmatmul.mubr.f32.gmra.mrb[0].mxu0 %v766
        %v859 = vpop.f32.mrb[0].mxu0
        %v860 = vadd.f32 0.0, %v859
        %v861 = vpop.f32.mrb[0].mxu0
        %v862 = vadd.f32 0.0, %v861
        %863 = vmatprep.mubr.f32.mxu0 0.0
        %864 = vmatmul.mubr.f32.gmra.mrb[0].mxu0 %v769
        %v865 = vpop.f32.mrb[0].mxu0
        %v866 = vadd.f32 0.0, %v865
        %v867 = vpop.f32.mrb[0].mxu0
        %v868 = vadd.f32 0.0, %v867
        %869 = vmatprep.mubr.f32.mxu0 0.0
        %870 = vmatmul.mubr.f32.gmra.mrb[0].mxu0 %v772
        %v871 = vpop.f32.mrb[0].mxu0
        %v872 = vadd.f32 0.0, %v871
        %v873 = vpop.f32.mrb[0].mxu0
        %v874 = vadd.f32 0.0, %v873
        %875 = vmatprep.mubr.f32.mxu0 0.0
        %876 = vmatmul.mubr.f32.gmra.mrb[0].mxu0 %v775
        %v877 = vpop.f32.mrb[0].mxu0
        %v878 = vadd.f32 0.0, %v877
        %v879 = vpop.f32.mrb[0].mxu0
        %v880 = vadd.f32 0.0, %v879
        %881 = vdwg.mxu0
        %882 = vmatprep.subr.mxu0 0.0
        %883 = vmatpush1.msra.mxu0 %v757
        %884 = vmatprep.subr.mxu0 0.0
        %885 = vmatpush1.msra.mxu0 %v785
        %886 = vmatprep.subr.mxu0 0.0
        %887 = vmatpush1.msra.mxu0 0.0
        %888 = vmatprep.subr.mxu0 0.0
        %889 = vmatpush1.msra.mxu0 0.0
        %890 = vmatprep.subr.mxu0 0.0
        %891 = vmatpush1.msra.mxu0 0.0
        %892 = vmatprep.subr.mxu0 0.0
        %893 = vmatpush1.msra.mxu0 0.0
        %894 = vmatprep.subr.mxu0 0.0
        %895 = vmatpush1.msra.mxu0 0.0
        %896 = vmatprep.subr.mxu0 0.0
        %897 = vmatpush1.msra.mxu0 0.0
        %898 = vmatprep.subr.mxu0 0.0
        %899 = vmatpush1.msra.mxu0 0.0
        %900 = vmatprep.subr.mxu0 0.0
        %901 = vmatpush1.msra.mxu0 0.0
        %902 = vmatprep.subr.mxu0 0.0
        %903 = vmatpush1.msra.mxu0 0.0
        %904 = vmatprep.subr.mxu0 0.0
        %905 = vmatpush1.msra.mxu0 0.0
        %906 = vmatprep.subr.mxu0 0.0
        %907 = vmatpush1.msra.mxu0 0.0
        %908 = vmatprep.subr.mxu0 0.0
        %909 = vmatpush1.msra.mxu0 0.0
        %910 = vmatprep.subr.mxu0 0.0
        %911 = vmatpush1.msra.mxu0 0.0
        %912 = vmatprep.subr.mxu0 0.0
        %913 = vmatpush1.msra.mxu0 0.0
        %914 = vmatprep.subr.mxu0 0.0
        %915 = vmatpush1.msra.mxu0 0.0
        %916 = vmatprep.subr.mxu0 0.0
        %917 = vmatpush1.msra.mxu0 0.0
        %918 = vmatprep.subr.mxu0 0.0
        %919 = vmatpush1.msra.mxu0 0.0
        %920 = vmatprep.subr.mxu0 0.0
        %921 = vmatpush1.msra.mxu0 0.0
        %922 = vmatprep.subr.mxu0 0.0
        %923 = vmatpush1.msra.mxu0 0.0
        %924 = vmatprep.subr.mxu0 0.0
        %925 = vmatpush1.msra.mxu0 0.0
        %926 = vmatprep.subr.mxu0 0.0
        %927 = vmatpush1.msra.mxu0 0.0
        %928 = vmatprep.subr.mxu0 0.0
        %929 = vmatpush1.msra.mxu0 0.0
        %930 = vmatprep.subr.mxu0 0.0
        %931 = vmatpush1.msra.mxu0 0.0
        %932 = vmatprep.subr.mxu0 0.0
        %933 = vmatpush1.msra.mxu0 0.0
        %934 = vmatprep.subr.mxu0 0.0
        %935 = vmatpush1.msra.mxu0 0.0
        %936 = vmatprep.subr.mxu0 0.0
        %937 = vmatpush1.msra.mxu0 0.0
        %938 = vmatprep.subr.mxu0 0.0
        %939 = vmatpush1.msra.mxu0 0.0
        %940 = vmatprep.subr.mxu0 0.0
        %941 = vmatpush1.msra.mxu0 0.0
        %942 = vmatprep.subr.mxu0 0.0
        %943 = vmatpush1.msra.mxu0 0.0
        %944 = vmatprep.subr.mxu0 0.0
        %945 = vmatpush1.msra.mxu0 0.0
        %946 = vmatprep.mubr.f32.mxu0 0.0
        %947 = vmatmul.mubr.f32.gmra.mrb[0].mxu0 %v763
        %v948 = vpop.f32.mrb[0].mxu0
        %v949 = vadd.f32 0.0, %v948
        %v950 = vpop.f32.mrb[0].mxu0
        %951 = vmatprep.mubr.f32.mxu0 0.0
        %952 = vmatmul.mubr.f32.gmra.mrb[0].mxu0 %v766
        %v953 = vpop.f32.mrb[0].mxu0
        %v954 = vadd.f32 0.0, %v953
        %v955 = vpop.f32.mrb[0].mxu0
        %956 = vmatprep.mubr.f32.mxu0 0.0
        %957 = vmatmul.mubr.f32.gmra.mrb[0].mxu0 %v769
        %v958 = vpop.f32.mrb[0].mxu0
        %v959 = vadd.f32 0.0, %v958
        %v960 = vpop.f32.mrb[0].mxu0
        %961 = vmatprep.mubr.f32.mxu0 0.0
        %962 = vmatmul.mubr.f32.gmra.mrb[0].mxu0 %v772
        %v963 = vpop.f32.mrb[0].mxu0
        %v964 = vadd.f32 0.0, %v963
        %v965 = vpop.f32.mrb[0].mxu0
        %966 = vmatprep.mubr.f32.mxu0 0.0
        %967 = vmatmul.mubr.f32.gmra.mrb[0].mxu0 %v775
        %v968 = vpop.f32.mrb[0].mxu0
        %v969 = vadd.f32 0.0, %v968
        %v970 = vpop.f32.mrb[0].mxu0
        %971 = vdwg.mxu0
        %972 = vrot.lane.b32.xlu0 %v854, 19
        %v973 = vpop.permute.xlu0 %972
        %974 = vrot.lane.b32.xlu0 %v856, 19
        %v975 = vpop.permute.xlu0 %974
        %976 = vrot.lane.b32.xlu0 %v949, 19
        %v977 = vpop.permute.xlu0 %976
        %v978 = vsel %vm582, %v975, %v977
        %v979 = vsel %vm582, %v973, %v975
        %v980 = vsel %vm582, %v977, %v973
        %v984 = vrot.slane %v854, 4
        %v985 = vrot.slane %v856, 4
        %v986 = vrot.slane %v949, 4
        %990 = vrot.lane.b32.xlu0 %v984, 18
        %v991 = vpop.permute.xlu0 %990
        %992 = vrot.lane.b32.xlu0 %v985, 18
        %v993 = vpop.permute.xlu0 %992
        %994 = vrot.lane.b32.xlu0 %v986, 18
        %v995 = vpop.permute.xlu0 %994
        %v996 = vsel %vm601, %v993, %v995
        %v997 = vsel %vm601, %v991, %v993
        %v998 = vsel %vm601, %v995, %v991
        %v999 = vadd.f32 %v980, %v998
        %v1000 = vadd.f32 %v979, %v997
        %v1001 = vadd.f32 %v978, %v996
        %1002 = vrot.lane.b32.xlu0 %v860, 17
        %v1003 = vpop.permute.xlu0 %1002
        %1004 = vrot.lane.b32.xlu0 %v862, 17
        %v1005 = vpop.permute.xlu0 %1004
        %1006 = vrot.lane.b32.xlu0 %v954, 17
        %v1007 = vpop.permute.xlu0 %1006
        %v1008 = vsel %vm614, %v1005, %v1007
        %v1009 = vsel %vm614, %v1003, %v1005
        %v1010 = vsel %vm614, %v1007, %v1003
        %v1011 = vadd.f32 %v999, %v1010
        %v1012 = vadd.f32 %v1000, %v1009
        %v1013 = vadd.f32 %v1001, %v1008
        %v1017 = vrot.slane %v860, 4
        %v1018 = vrot.slane %v862, 4
        %v1019 = vrot.slane %v954, 4
        %1023 = vrot.lane.b32.xlu0 %v1017, 1
        %v1024 = vpop.permute.xlu0 %1023
        %1025 = vrot.lane.b32.xlu0 %v1018, 1
        %v1026 = vpop.permute.xlu0 %1025
        %1027 = vrot.lane.b32.xlu0 %v1019, 1
        %v1028 = vpop.permute.xlu0 %1027
        %v1029 = vsel %vm636, %v1026, %v1028
        %v1030 = vsel %vm636, %v1024, %v1026
        %v1031 = vsel %vm636, %v1028, %v1024
        %v1032 = vadd.f32 %v1011, %v1031
        %v1033 = vadd.f32 %v1012, %v1030
        %v1034 = vadd.f32 %v1013, %v1029
        %v1035 = vadd.f32 %v1032, %v866
        %v1036 = vadd.f32 %v1033, %v868
        %v1037 = vadd.f32 %v1034, %v959
        %v1041 = vrot.slane %v866, 4
        %v1042 = vrot.slane %v868, 4
        %v1043 = vrot.slane %v959, 4
        %1047 = vrot.lane.b32.xlu0 %v1041, 127
        %v1048 = vpop.permute.xlu0 %1047
        %1049 = vrot.lane.b32.xlu0 %v1042, 127
        %v1050 = vpop.permute.xlu0 %1049
        %1051 = vrot.lane.b32.xlu0 %v1043, 127
        %v1052 = vpop.permute.xlu0 %1051
        %v1053 = vsel %vm661, %v1050, %v1052
        %v1054 = vsel %vm661, %v1048, %v1050
        %v1055 = vsel %vm661, %v1052, %v1048
        %v1056 = vadd.f32 %v1035, %v1054
        %v1057 = vadd.f32 %v1036, %v1053
        %v1058 = vadd.f32 %v1037, %v1055
        %1059 = vrot.lane.b32.xlu0 %v872, 111
        %v1060 = vpop.permute.xlu0 %1059
        %1061 = vrot.lane.b32.xlu0 %v874, 111
        %v1062 = vpop.permute.xlu0 %1061
        %1063 = vrot.lane.b32.xlu0 %v964, 111
        %v1064 = vpop.permute.xlu0 %1063
        %v1065 = vsel %vm674, %v1062, %v1064
        %v1066 = vsel %vm674, %v1060, %v1062
        %v1067 = vsel %vm674, %v1064, %v1060
        %v1068 = vadd.f32 %v1056, %v1066
        %v1069 = vadd.f32 %v1057, %v1065
        %v1070 = vadd.f32 %v1058, %v1067
        %v1074 = vrot.slane %v872, 4
        %v1075 = vrot.slane %v874, 4
        %v1076 = vrot.slane %v964, 4
        %1080 = vrot.lane.b32.xlu0 %v1074, 110
        %v1081 = vpop.permute.xlu0 %1080
        %1082 = vrot.lane.b32.xlu0 %v1075, 110
        %v1083 = vpop.permute.xlu0 %1082
        %1084 = vrot.lane.b32.xlu0 %v1076, 110
        %v1085 = vpop.permute.xlu0 %1084
        %v1086 = vsel %vm696, %v1083, %v1085
        %v1087 = vsel %vm696, %v1081, %v1083
        %v1088 = vsel %vm696, %v1085, %v1081
        %v1089 = vadd.f32 %v1068, %v1087
        %v1090 = vadd.f32 %v1069, %v1086
        %v1091 = vadd.f32 %v1070, %v1088
        %1092 = vrot.lane.b32.xlu0 %v878, 109
        %v1093 = vpop.permute.xlu0 %1092
        %1094 = vrot.lane.b32.xlu0 %v880, 109
        %v1095 = vpop.permute.xlu0 %1094
        %1096 = vrot.lane.b32.xlu0 %v969, 109
        %v1097 = vpop.permute.xlu0 %1096
        %v1098 = vsel %vm709, %v1095, %v1097
        %v1099 = vsel %vm709, %v1093, %v1095
        %v1100 = vsel %vm709, %v1097, %v1093
        %v1101 = vadd.f32 %v1089, %v1099
        %v1102 = vadd.f32 %v1090, %v1098
        %v1103 = vadd.f32 %v1091, %v1100
        %v1104 = vld [vmem:[%s5] sm:$0xf]
        %1106 = vset.pattern.permute.xlu0 0
        %1107 = vperm.xlu0 %1106, %v1104
        %v1108 = vpop.permute.xlu0 %1107
        %v1110 = vadd.f32 %v1101, %v1108
        %v1111 = vadd.f32 %v1102, %v1108
        %v1112 = vadd.f32 %v1103, %v1108
        %v1113 = vmax.f32 %v1110, 0.0
        %v1114 = vmax.f32 %v1111, 0.0
        %v1115 = vmax.f32 %v1112, 0.0
        %v1116 = vmul.f32 %v1113, %v732
        %v1117 = vmul.f32 %v1114, %v736
        %v1118 = vmul.f32 %v1115, %v740
        %v1122 = vrot.slane %v1116, 4
        %v1123 = vrot.slane %v1117, 4
        %v1124 = vrot.slane %v1118, 4
        %1128 = vst [vmem:[#allocation2 + $0x18] sm:$0xf0] %v1122
        %1129 = vst [vmem:[#allocation2 + $0x20] sm:$0xf0] %v1123
        %1130 = vst [vmem:[#allocation2 + $0x28] sm:$0xf0] %v1124
        %v1131 = vld [vmem:[%s6] sm:$0xff]
        %v1132 = vld [vmem:[%s6 + $0x8] sm:$0xff]
        %v1133 = vld [vmem:[%s6 + $0x10] sm:$0xff]
        %v1134 = vld [vmem:[%s6 + $0x18] sm:$0xff]
        %v1135 = vld [vmem:[%s6 + $0x20] sm:$0xf]
        %v1136 = vld [vmem:[#allocation2] sm:$0xff]
        %v1137 = vld [vmem:[#allocation2 + $0x8] sm:$0xff]
        %v1138 = vld [vmem:[#allocation2 + $0x10] sm:$0xff]
        %v1139 = vld [vmem:[#allocation2 + $0x18] sm:$0xff]
        %v1140 = vld [vmem:[#allocation2 + $0x20] sm:$0xff]
        %v1141 = vld [vmem:[#allocation2 + $0x28] sm:$0xff]
        %vm1142 = vcmask 130048
        %v1144 = vsel %vm1142, %v1131, 0
        %v1147 = vsel %vm1142, %v1132, 0
        %v1150 = vsel %vm1142, %v1133, 0
        %v1153 = vsel %vm1142, %v1134, 0
        %v1156 = vsel %vm1142, %v1135, 0
        %1158 = vmatprep.subr.mxu0 %v1137
        %1159 = vmatpush1.msra.mxu0 %v1136
        %1160 = vmatprep.subr.mxu0 %v1140
        %1161 = vmatpush1.msra.mxu0 %v1139
        %1162 = vmatprep.subr.mxu0 0.0
        %1163 = vmatpush1.msra.mxu0 0.0
        %1164 = vmatprep.subr.mxu0 0.0
        %1165 = vmatpush1.msra.mxu0 0.0
        %1166 = vmatprep.subr.mxu0 0.0
        %1167 = vmatpush1.msra.mxu0 0.0
        %1168 = vmatprep.subr.mxu0 0.0
        %1169 = vmatpush1.msra.mxu0 0.0
        %1170 = vmatprep.subr.mxu0 0.0
        %1171 = vmatpush1.msra.mxu0 0.0
        %1172 = vmatprep.subr.mxu0 0.0
        %1173 = vmatpush1.msra.mxu0 0.0
        %1174 = vmatprep.subr.mxu0 0.0
        %1175 = vmatpush1.msra.mxu0 0.0
        %1176 = vmatprep.subr.mxu0 0.0
        %1177 = vmatpush1.msra.mxu0 0.0
        %1178 = vmatprep.subr.mxu0 0.0
        %1179 = vmatpush1.msra.mxu0 0.0
        %1180 = vmatprep.subr.mxu0 0.0
        %1181 = vmatpush1.msra.mxu0 0.0
        %1182 = vmatprep.subr.mxu0 0.0
        %1183 = vmatpush1.msra.mxu0 0.0
        %1184 = vmatprep.subr.mxu0 0.0
        %1185 = vmatpush1.msra.mxu0 0.0
        %1186 = vmatprep.subr.mxu0 0.0
        %1187 = vmatpush1.msra.mxu0 0.0
        %1188 = vmatprep.subr.mxu0 0.0
        %1189 = vmatpush1.msra.mxu0 0.0
        %1190 = vmatprep.subr.mxu0 0.0
        %1191 = vmatpush1.msra.mxu0 0.0
        %1192 = vmatprep.subr.mxu0 0.0
        %1193 = vmatpush1.msra.mxu0 0.0
        %1194 = vmatprep.subr.mxu0 0.0
        %1195 = vmatpush1.msra.mxu0 0.0
        %1196 = vmatprep.subr.mxu0 0.0
        %1197 = vmatpush1.msra.mxu0 0.0
        %1198 = vmatprep.subr.mxu0 0.0
        %1199 = vmatpush1.msra.mxu0 0.0
        %1200 = vmatprep.subr.mxu0 0.0
        %1201 = vmatpush1.msra.mxu0 0.0
        %1202 = vmatprep.subr.mxu0 0.0
        %1203 = vmatpush1.msra.mxu0 0.0
        %1204 = vmatprep.subr.mxu0 0.0
        %1205 = vmatpush1.msra.mxu0 0.0
        %1206 = vmatprep.subr.mxu0 0.0
        %1207 = vmatpush1.msra.mxu0 0.0
        %1208 = vmatprep.subr.mxu0 0.0
        %1209 = vmatpush1.msra.mxu0 0.0
        %1210 = vmatprep.subr.mxu0 0.0
        %1211 = vmatpush1.msra.mxu0 0.0
        %1212 = vmatprep.subr.mxu0 0.0
        %1213 = vmatpush1.msra.mxu0 0.0
        %1214 = vmatprep.subr.mxu0 0.0
        %1215 = vmatpush1.msra.mxu0 0.0
        %1216 = vmatprep.subr.mxu0 0.0
        %1217 = vmatpush1.msra.mxu0 0.0
        %1218 = vmatprep.subr.mxu0 0.0
        %1219 = vmatpush1.msra.mxu0 0.0
        %1220 = vmatprep.subr.mxu0 0.0
        %1221 = vmatpush1.msra.mxu0 0.0
        %1222 = vmatprep.mubr.f32.mxu0 0.0
        %1223 = vmatmul.mubr.f32.gmra.mrb[0].mxu0 %v1144
        %v1224 = vpop.f32.mrb[0].mxu0
        %v1225 = vadd.f32 0.0, %v1224
        %v1226 = vpop.f32.mrb[0].mxu0
        %v1227 = vadd.f32 0.0, %v1226
        %1228 = vmatprep.mubr.f32.mxu0 0.0
        %1229 = vmatmul.mubr.f32.gmra.mrb[0].mxu0 %v1147
        %v1230 = vpop.f32.mrb[0].mxu0
        %v1231 = vadd.f32 0.0, %v1230
        %v1232 = vpop.f32.mrb[0].mxu0
        %v1233 = vadd.f32 0.0, %v1232
        %1234 = vmatprep.mubr.f32.mxu0 0.0
        %1235 = vmatmul.mubr.f32.gmra.mrb[0].mxu0 %v1150
        %v1236 = vpop.f32.mrb[0].mxu0
        %v1237 = vadd.f32 0.0, %v1236
        %v1238 = vpop.f32.mrb[0].mxu0
        %v1239 = vadd.f32 0.0, %v1238
        %1240 = vmatprep.mubr.f32.mxu0 0.0
        %1241 = vmatmul.mubr.f32.gmra.mrb[0].mxu0 %v1153
        %v1242 = vpop.f32.mrb[0].mxu0
        %v1243 = vadd.f32 0.0, %v1242
        %v1244 = vpop.f32.mrb[0].mxu0
        %v1245 = vadd.f32 0.0, %v1244
        %1246 = vmatprep.mubr.f32.mxu0 0.0
        %1247 = vmatmul.mubr.f32.gmra.mrb[0].mxu0 %v1156
        %v1248 = vpop.f32.mrb[0].mxu0
        %v1249 = vadd.f32 0.0, %v1248
        %v1250 = vpop.f32.mrb[0].mxu0
        %v1251 = vadd.f32 0.0, %v1250
        %1252 = vdwg.mxu0
        %1253 = vmatprep.subr.mxu0 0.0
        %1254 = vmatpush1.msra.mxu0 %v1138
        %1255 = vmatprep.subr.mxu0 0.0
        %1256 = vmatpush1.msra.mxu0 %v1141
        %1257 = vmatprep.subr.mxu0 0.0
        %1258 = vmatpush1.msra.mxu0 0.0
        %1259 = vmatprep.subr.mxu0 0.0
        %1260 = vmatpush1.msra.mxu0 0.0
        %1261 = vmatprep.subr.mxu0 0.0
        %1262 = vmatpush1.msra.mxu0 0.0
        %1263 = vmatprep.subr.mxu0 0.0
        %1264 = vmatpush1.msra.mxu0 0.0
        %1265 = vmatprep.subr.mxu0 0.0
        %1266 = vmatpush1.msra.mxu0 0.0
        %1267 = vmatprep.subr.mxu0 0.0
        %1268 = vmatpush1.msra.mxu0 0.0
        %1269 = vmatprep.subr.mxu0 0.0
        %1270 = vmatpush1.msra.mxu0 0.0
        %1271 = vmatprep.subr.mxu0 0.0
        %1272 = vmatpush1.msra.mxu0 0.0
        %1273 = vmatprep.subr.mxu0 0.0
        %1274 = vmatpush1.msra.mxu0 0.0
        %1275 = vmatprep.subr.mxu0 0.0
        %1276 = vmatpush1.msra.mxu0 0.0
        %1277 = vmatprep.subr.mxu0 0.0
        %1278 = vmatpush1.msra.mxu0 0.0
        %1279 = vmatprep.subr.mxu0 0.0
        %1280 = vmatpush1.msra.mxu0 0.0
        %1281 = vmatprep.subr.mxu0 0.0
        %1282 = vmatpush1.msra.mxu0 0.0
        %1283 = vmatprep.subr.mxu0 0.0
        %1284 = vmatpush1.msra.mxu0 0.0
        %1285 = vmatprep.subr.mxu0 0.0
        %1286 = vmatpush1.msra.mxu0 0.0
        %1287 = vmatprep.subr.mxu0 0.0
        %1288 = vmatpush1.msra.mxu0 0.0
        %1289 = vmatprep.subr.mxu0 0.0
        %1290 = vmatpush1.msra.mxu0 0.0
        %1291 = vmatprep.subr.mxu0 0.0
        %1292 = vmatpush1.msra.mxu0 0.0
        %1293 = vmatprep.subr.mxu0 0.0
        %1294 = vmatpush1.msra.mxu0 0.0
        %1295 = vmatprep.subr.mxu0 0.0
        %1296 = vmatpush1.msra.mxu0 0.0
        %1297 = vmatprep.subr.mxu0 0.0
        %1298 = vmatpush1.msra.mxu0 0.0
        %1299 = vmatprep.subr.mxu0 0.0
        %1300 = vmatpush1.msra.mxu0 0.0
        %1301 = vmatprep.subr.mxu0 0.0
        %1302 = vmatpush1.msra.mxu0 0.0
        %1303 = vmatprep.subr.mxu0 0.0
        %1304 = vmatpush1.msra.mxu0 0.0
        %1305 = vmatprep.subr.mxu0 0.0
        %1306 = vmatpush1.msra.mxu0 0.0
        %1307 = vmatprep.subr.mxu0 0.0
        %1308 = vmatpush1.msra.mxu0 0.0
        %1309 = vmatprep.subr.mxu0 0.0
        %1310 = vmatpush1.msra.mxu0 0.0
        %1311 = vmatprep.subr.mxu0 0.0
        %1312 = vmatpush1.msra.mxu0 0.0
        %1313 = vmatprep.subr.mxu0 0.0
        %1314 = vmatpush1.msra.mxu0 0.0
        %1315 = vmatprep.subr.mxu0 0.0
        %1316 = vmatpush1.msra.mxu0 0.0
        %1317 = vmatprep.mubr.f32.mxu0 0.0
        %1318 = vmatmul.mubr.f32.gmra.mrb[0].mxu0 %v1144
        %v1319 = vpop.f32.mrb[0].mxu0
        %v1320 = vadd.f32 0.0, %v1319
        %v1321 = vpop.f32.mrb[0].mxu0
        %1322 = vmatprep.mubr.f32.mxu0 0.0
        %1323 = vmatmul.mubr.f32.gmra.mrb[0].mxu0 %v1147
        %v1324 = vpop.f32.mrb[0].mxu0
        %v1325 = vadd.f32 0.0, %v1324
        %v1326 = vpop.f32.mrb[0].mxu0
        %1327 = vmatprep.mubr.f32.mxu0 0.0
        %1328 = vmatmul.mubr.f32.gmra.mrb[0].mxu0 %v1150
        %v1329 = vpop.f32.mrb[0].mxu0
        %v1330 = vadd.f32 0.0, %v1329
        %v1331 = vpop.f32.mrb[0].mxu0
        %1332 = vmatprep.mubr.f32.mxu0 0.0
        %1333 = vmatmul.mubr.f32.gmra.mrb[0].mxu0 %v1153
        %v1334 = vpop.f32.mrb[0].mxu0
        %v1335 = vadd.f32 0.0, %v1334
        %v1336 = vpop.f32.mrb[0].mxu0
        %1337 = vmatprep.mubr.f32.mxu0 0.0
        %1338 = vmatmul.mubr.f32.gmra.mrb[0].mxu0 %v1156
        %v1339 = vpop.f32.mrb[0].mxu0
        %v1340 = vadd.f32 0.0, %v1339
        %v1341 = vpop.f32.mrb[0].mxu0
        %1342 = vdwg.mxu0
        %1343 = vrot.lane.b32.xlu0 %v1225, 19
        %v1344 = vpop.permute.xlu0 %1343
        %1345 = vrot.lane.b32.xlu0 %v1227, 19
        %v1346 = vpop.permute.xlu0 %1345
        %1347 = vrot.lane.b32.xlu0 %v1320, 19
        %v1348 = vpop.permute.xlu0 %1347
        %v1349 = vsel %vm582, %v1346, %v1348
        %v1350 = vsel %vm582, %v1344, %v1346
        %v1351 = vsel %vm582, %v1348, %v1344
        %v1355 = vrot.slane %v1225, 4
        %v1356 = vrot.slane %v1227, 4
        %v1357 = vrot.slane %v1320, 4
        %1361 = vrot.lane.b32.xlu0 %v1355, 18
        %v1362 = vpop.permute.xlu0 %1361
        %1363 = vrot.lane.b32.xlu0 %v1356, 18
        %v1364 = vpop.permute.xlu0 %1363
        %1365 = vrot.lane.b32.xlu0 %v1357, 18
        %v1366 = vpop.permute.xlu0 %1365
        %v1367 = vsel %vm601, %v1364, %v1366
        %v1368 = vsel %vm601, %v1362, %v1364
        %v1369 = vsel %vm601, %v1366, %v1362
        %v1370 = vadd.f32 %v1351, %v1369
        %v1371 = vadd.f32 %v1350, %v1368
        %v1372 = vadd.f32 %v1349, %v1367
        %1373 = vrot.lane.b32.xlu0 %v1231, 17
        %v1374 = vpop.permute.xlu0 %1373
        %1375 = vrot.lane.b32.xlu0 %v1233, 17
        %v1376 = vpop.permute.xlu0 %1375
        %1377 = vrot.lane.b32.xlu0 %v1325, 17
        %v1378 = vpop.permute.xlu0 %1377
        %v1379 = vsel %vm614, %v1376, %v1378
        %v1380 = vsel %vm614, %v1374, %v1376
        %v1381 = vsel %vm614, %v1378, %v1374
        %v1382 = vadd.f32 %v1370, %v1381
        %v1383 = vadd.f32 %v1371, %v1380
        %v1384 = vadd.f32 %v1372, %v1379
        %v1388 = vrot.slane %v1231, 4
        %v1389 = vrot.slane %v1233, 4
        %v1390 = vrot.slane %v1325, 4
        %1394 = vrot.lane.b32.xlu0 %v1388, 1
        %v1395 = vpop.permute.xlu0 %1394
        %1396 = vrot.lane.b32.xlu0 %v1389, 1
        %v1397 = vpop.permute.xlu0 %1396
        %1398 = vrot.lane.b32.xlu0 %v1390, 1
        %v1399 = vpop.permute.xlu0 %1398
        %v1400 = vsel %vm636, %v1397, %v1399
        %v1401 = vsel %vm636, %v1395, %v1397
        %v1402 = vsel %vm636, %v1399, %v1395
        %v1403 = vadd.f32 %v1382, %v1402
        %v1404 = vadd.f32 %v1383, %v1401
        %v1405 = vadd.f32 %v1384, %v1400
        %v1406 = vadd.f32 %v1403, %v1237
        %v1407 = vadd.f32 %v1404, %v1239
        %v1408 = vadd.f32 %v1405, %v1330
        %v1412 = vrot.slane %v1237, 4
        %v1413 = vrot.slane %v1239, 4
        %v1414 = vrot.slane %v1330, 4
        %1418 = vrot.lane.b32.xlu0 %v1412, 127
        %v1419 = vpop.permute.xlu0 %1418
        %1420 = vrot.lane.b32.xlu0 %v1413, 127
        %v1421 = vpop.permute.xlu0 %1420
        %1422 = vrot.lane.b32.xlu0 %v1414, 127
        %v1423 = vpop.permute.xlu0 %1422
        %v1424 = vsel %vm661, %v1421, %v1423
        %v1425 = vsel %vm661, %v1419, %v1421
        %v1426 = vsel %vm661, %v1423, %v1419
        %v1427 = vadd.f32 %v1406, %v1425
        %v1428 = vadd.f32 %v1407, %v1424
        %v1429 = vadd.f32 %v1408, %v1426
        %1430 = vrot.lane.b32.xlu0 %v1243, 111
        %v1431 = vpop.permute.xlu0 %1430
        %1432 = vrot.lane.b32.xlu0 %v1245, 111
        %v1433 = vpop.permute.xlu0 %1432
        %1434 = vrot.lane.b32.xlu0 %v1335, 111
        %v1435 = vpop.permute.xlu0 %1434
        %v1436 = vsel %vm674, %v1433, %v1435
        %v1437 = vsel %vm674, %v1431, %v1433
        %v1438 = vsel %vm674, %v1435, %v1431
        %v1439 = vadd.f32 %v1427, %v1437
        %v1440 = vadd.f32 %v1428, %v1436
        %v1441 = vadd.f32 %v1429, %v1438
        %v1445 = vrot.slane %v1243, 4
        %v1446 = vrot.slane %v1245, 4
        %v1447 = vrot.slane %v1335, 4
        %1451 = vrot.lane.b32.xlu0 %v1445, 110
        %v1452 = vpop.permute.xlu0 %1451
        %1453 = vrot.lane.b32.xlu0 %v1446, 110
        %v1454 = vpop.permute.xlu0 %1453
        %1455 = vrot.lane.b32.xlu0 %v1447, 110
        %v1456 = vpop.permute.xlu0 %1455
        %v1457 = vsel %vm696, %v1454, %v1456
        %v1458 = vsel %vm696, %v1452, %v1454
        %v1459 = vsel %vm696, %v1456, %v1452
        %v1460 = vadd.f32 %v1439, %v1458
        %v1461 = vadd.f32 %v1440, %v1457
        %v1462 = vadd.f32 %v1441, %v1459
        %1463 = vrot.lane.b32.xlu0 %v1249, 109
        %v1464 = vpop.permute.xlu0 %1463
        %1465 = vrot.lane.b32.xlu0 %v1251, 109
        %v1466 = vpop.permute.xlu0 %1465
        %1467 = vrot.lane.b32.xlu0 %v1340, 109
        %v1468 = vpop.permute.xlu0 %1467
        %v1469 = vsel %vm709, %v1466, %v1468
        %v1470 = vsel %vm709, %v1464, %v1466
        %v1471 = vsel %vm709, %v1468, %v1464
        %v1472 = vadd.f32 %v1460, %v1470
        %v1473 = vadd.f32 %v1461, %v1469
        %v1474 = vadd.f32 %v1462, %v1471
        %v1475 = vld [vmem:[%s7] sm:$0xf]
        %1477 = vset.pattern.permute.xlu0 0
        %1478 = vperm.xlu0 %1477, %v1475
        %v1479 = vpop.permute.xlu0 %1478
        %v1481 = vadd.f32 %v1472, %v1479
        %v1482 = vadd.f32 %v1473, %v1479
        %v1483 = vadd.f32 %v1474, %v1479
        %v1484 = vmax.f32 %v1481, 0.0
        %v1485 = vmax.f32 %v1482, 0.0
        %v1486 = vmax.f32 %v1483, 0.0
        %v1487 = vmul.f32 %v1484, %v732
        %v1488 = vmul.f32 %v1485, %v736
        %v1489 = vmul.f32 %v1486, %v740
        %1490 = vst [vmem:[#allocation2 + $0x30] sm:$0xf] %v1487
        %1491 = vst [vmem:[#allocation2 + $0x38] sm:$0xf] %v1488
        %1492 = vst [vmem:[#allocation2 + $0x40] sm:$0xf] %v1489
        %v1493 = vld [vmem:[%s8] sm:$0xff]
        %v1494 = vld [vmem:[#allocation2] sm:$0xff]
        %v1495 = vld [vmem:[#allocation2 + $0x8] sm:$0xff]
        %v1496 = vld [vmem:[#allocation2 + $0x10] sm:$0xff]
        %v1497 = vld [vmem:[#allocation2 + $0x18] sm:$0xff]
        %v1498 = vld [vmem:[#allocation2 + $0x20] sm:$0xff]
        %v1499 = vld [vmem:[#allocation2 + $0x28] sm:$0xff]
        %v1500 = vld [vmem:[#allocation2 + $0x30] sm:$0xf]
        %v1501 = vld [vmem:[#allocation2 + $0x38] sm:$0xf]
        %v1502 = vld [vmem:[#allocation2 + $0x40] sm:$0xf]
        %v1503 = vld [vmem:[%s9] sm:$0xff]
        %1505 = vset.pattern.permute.xlu0 0
        %1506 = vperm.xlu0 %1505, %v1503
        %v1507 = vpop.permute.xlu0 %1506
        %vm1509 = vcmask 162816
        %v1511 = vsel %vm1509, %v1493, 0
        %v1514 = vsel %vm777, %v1500, 0
        %v1517 = vsel %vm777, %v1501, 0
        %v1520 = vsel %vm777, %v1502, 0
        %1522 = vmatprep.subr.mxu0 %v1495
        %1523 = vmatpush1.msra.mxu0 %v1494
        %1524 = vmatprep.subr.mxu0 %v1498
        %1525 = vmatpush1.msra.mxu0 %v1497
        %1526 = vmatprep.subr.mxu0 %v1517
        %1527 = vmatpush1.msra.mxu0 %v1514
        %1528 = vmatprep.subr.mxu0 0.0
        %1529 = vmatpush1.msra.mxu0 0.0
        %1530 = vmatprep.subr.mxu0 0.0
        %1531 = vmatpush1.msra.mxu0 0.0
        %1532 = vmatprep.subr.mxu0 0.0
        %1533 = vmatpush1.msra.mxu0 0.0
        %1534 = vmatprep.subr.mxu0 0.0
        %1535 = vmatpush1.msra.mxu0 0.0
        %1536 = vmatprep.subr.mxu0 0.0
        %1537 = vmatpush1.msra.mxu0 0.0
        %1538 = vmatprep.subr.mxu0 0.0
        %1539 = vmatpush1.msra.mxu0 0.0
        %1540 = vmatprep.subr.mxu0 0.0
        %1541 = vmatpush1.msra.mxu0 0.0
        %1542 = vmatprep.subr.mxu0 0.0
        %1543 = vmatpush1.msra.mxu0 0.0
        %1544 = vmatprep.subr.mxu0 0.0
        %1545 = vmatpush1.msra.mxu0 0.0
        %1546 = vmatprep.subr.mxu0 0.0
        %1547 = vmatpush1.msra.mxu0 0.0
        %1548 = vmatprep.subr.mxu0 0.0
        %1549 = vmatpush1.msra.mxu0 0.0
        %1550 = vmatprep.subr.mxu0 0.0
        %1551 = vmatpush1.msra.mxu0 0.0
        %1552 = vmatprep.subr.mxu0 0.0
        %1553 = vmatpush1.msra.mxu0 0.0
        %1554 = vmatprep.subr.mxu0 0.0
        %1555 = vmatpush1.msra.mxu0 0.0
        %1556 = vmatprep.subr.mxu0 0.0
        %1557 = vmatpush1.msra.mxu0 0.0
        %1558 = vmatprep.subr.mxu0 0.0
        %1559 = vmatpush1.msra.mxu0 0.0
        %1560 = vmatprep.subr.mxu0 0.0
        %1561 = vmatpush1.msra.mxu0 0.0
        %1562 = vmatprep.subr.mxu0 0.0
        %1563 = vmatpush1.msra.mxu0 0.0
        %1564 = vmatprep.subr.mxu0 0.0
        %1565 = vmatpush1.msra.mxu0 0.0
        %1566 = vmatprep.subr.mxu0 0.0
        %1567 = vmatpush1.msra.mxu0 0.0
        %1568 = vmatprep.subr.mxu0 0.0
        %1569 = vmatpush1.msra.mxu0 0.0
        %1570 = vmatprep.subr.mxu0 0.0
        %1571 = vmatpush1.msra.mxu0 0.0
        %1572 = vmatprep.subr.mxu0 0.0
        %1573 = vmatpush1.msra.mxu0 0.0
        %1574 = vmatprep.subr.mxu0 0.0
        %1575 = vmatpush1.msra.mxu0 0.0
        %1576 = vmatprep.subr.mxu0 0.0
        %1577 = vmatpush1.msra.mxu0 0.0
        %1578 = vmatprep.subr.mxu0 0.0
        %1579 = vmatpush1.msra.mxu0 0.0
        %1580 = vmatprep.subr.mxu0 0.0
        %1581 = vmatpush1.msra.mxu0 0.0
        %1582 = vmatprep.subr.mxu0 0.0
        %1583 = vmatpush1.msra.mxu0 0.0
        %1584 = vmatprep.subr.mxu0 0.0
        %1585 = vmatpush1.msra.mxu0 0.0
        %1586 = vmatprep.mubr.f32.mxu0 0.0
        %1587 = vmatmul.mubr.f32.gmra.mrb[0].mxu0 %v1511
        %v1588 = vpop.f32.mrb[0].mxu0
        %v1589 = vadd.f32 %v1507, %v1588
        %v1590 = vpop.f32.mrb[0].mxu0
        %v1591 = vadd.f32 %v1507, %v1590
        %1592 = vdwg.mxu0
        %1593 = vmatprep.subr.mxu0 0.0
        %1594 = vmatpush1.msra.mxu0 %v1496
        %1595 = vmatprep.subr.mxu0 0.0
        %1596 = vmatpush1.msra.mxu0 %v1499
        %1597 = vmatprep.subr.mxu0 0.0
        %1598 = vmatpush1.msra.mxu0 %v1520
        %1599 = vmatprep.subr.mxu0 0.0
        %1600 = vmatpush1.msra.mxu0 0.0
        %1601 = vmatprep.subr.mxu0 0.0
        %1602 = vmatpush1.msra.mxu0 0.0
        %1603 = vmatprep.subr.mxu0 0.0
        %1604 = vmatpush1.msra.mxu0 0.0
        %1605 = vmatprep.subr.mxu0 0.0
        %1606 = vmatpush1.msra.mxu0 0.0
        %1607 = vmatprep.subr.mxu0 0.0
        %1608 = vmatpush1.msra.mxu0 0.0
        %1609 = vmatprep.subr.mxu0 0.0
        %1610 = vmatpush1.msra.mxu0 0.0
        %1611 = vmatprep.subr.mxu0 0.0
        %1612 = vmatpush1.msra.mxu0 0.0
        %1613 = vmatprep.subr.mxu0 0.0
        %1614 = vmatpush1.msra.mxu0 0.0
        %1615 = vmatprep.subr.mxu0 0.0
        %1616 = vmatpush1.msra.mxu0 0.0
        %1617 = vmatprep.subr.mxu0 0.0
        %1618 = vmatpush1.msra.mxu0 0.0
        %1619 = vmatprep.subr.mxu0 0.0
        %1620 = vmatpush1.msra.mxu0 0.0
        %1621 = vmatprep.subr.mxu0 0.0
        %1622 = vmatpush1.msra.mxu0 0.0
        %1623 = vmatprep.subr.mxu0 0.0
        %1624 = vmatpush1.msra.mxu0 0.0
        %1625 = vmatprep.subr.mxu0 0.0
        %1626 = vmatpush1.msra.mxu0 0.0
        %1627 = vmatprep.subr.mxu0 0.0
        %1628 = vmatpush1.msra.mxu0 0.0
        %1629 = vmatprep.subr.mxu0 0.0
        %1630 = vmatpush1.msra.mxu0 0.0
        %1631 = vmatprep.subr.mxu0 0.0
        %1632 = vmatpush1.msra.mxu0 0.0
        %1633 = vmatprep.subr.mxu0 0.0
        %1634 = vmatpush1.msra.mxu0 0.0
        %1635 = vmatprep.subr.mxu0 0.0
        %1636 = vmatpush1.msra.mxu0 0.0
        %1637 = vmatprep.subr.mxu0 0.0
        %1638 = vmatpush1.msra.mxu0 0.0
        %1639 = vmatprep.subr.mxu0 0.0
        %1640 = vmatpush1.msra.mxu0 0.0
        %1641 = vmatprep.subr.mxu0 0.0
        %1642 = vmatpush1.msra.mxu0 0.0
        %1643 = vmatprep.subr.mxu0 0.0
        %1644 = vmatpush1.msra.mxu0 0.0
        %1645 = vmatprep.subr.mxu0 0.0
        %1646 = vmatpush1.msra.mxu0 0.0
        %1647 = vmatprep.subr.mxu0 0.0
        %1648 = vmatpush1.msra.mxu0 0.0
        %1649 = vmatprep.subr.mxu0 0.0
        %1650 = vmatpush1.msra.mxu0 0.0
        %1651 = vmatprep.subr.mxu0 0.0
        %1652 = vmatpush1.msra.mxu0 0.0
        %1653 = vmatprep.subr.mxu0 0.0
        %1654 = vmatpush1.msra.mxu0 0.0
        %1655 = vmatprep.subr.mxu0 0.0
        %1656 = vmatpush1.msra.mxu0 0.0
        %1657 = vmatprep.mubr.f32.mxu0 0.0
        %1658 = vmatmul.mubr.f32.gmra.mrb[0].mxu0 %v1511
        %v1659 = vpop.f32.mrb[0].mxu0
        %v1660 = vadd.f32 %v1507, %v1659
        %v1661 = vpop.f32.mrb[0].mxu0
        %1662 = vdwg.mxu0
        %v1663 = vadd.f32 %v1589, %v359
        %v1664 = vadd.f32 %v1591, %v360
        %v1665 = vadd.f32 %v1660, %v361
        %1666 = vst [vmem:[%s352] sm:$0xff] %v1663
        %1667 = vst [vmem:[%s352 + $0x8] sm:$0xff] %v1664
        %1668 = vst [vmem:[%s352 + $0x10] sm:$0xff] %v1665
        %s1669 = sand.u32 %s247, 1
        %s1670 = scalar_lea.sflag [#allocation4], %s1669
        %s1671 = sand.u32 %s247, 1
        %s1672 = smul.addr %s1671, 24
        %s1673 = scalar_lea.vmem [#allocation3], %s1672
        // Predicated region
        $region61: #{tpu_custom_call.1} parent=59 // pred_check
          %p1674 = pneg %p257
        $region62: #{tpu_custom_call.1} parent=59 // pred_check_branch
          %1676 = sbr.rel (%p1674) target = $region64
        $region63: #{tpu_custom_call.1} parent=59 // pred_region
          %s1678 = ssub.s32 384, 384
          %1679 = vsyncadd %s1670, %s1678
          %s1680 = smul.addr %s24, 3
          %s1681 = smul.addr %s1680, 128
          %s1682 = scalar_lea.hbm %s10, %s1681
          %s1684 = sshll.u32 %s1673, 4
          %s1685 = int_to_ptr.vmem [resolvable:$true] %s1684
          %1687 = dma.vmem_to_hbm [thread:$0]  %s1685, 384, %s1682, %s1670
        $region64: #{tpu_custom_call.1} parent=59 // pred_fallthru
          _
      $region60: #{tpu_custom_call.1} parent=5 // pred_fallthru
        _
      %p1688 = scmp.le.s32.totalorder 2, %s19
      // Predicated region
      $region65: #{tpu_custom_call.1} parent=5 // pred_check
        %p1689 = pneg %p1688
      $region66: #{tpu_custom_call.1} parent=5 // pred_check_branch
        %1691 = sbr.rel (%p1689) target = $region68
      $region67: #{tpu_custom_call.1} parent=5 // pred_region
        %s1692 = ssub.s32 %s19, 2
        // Predicated region
        $region69: #{tpu_custom_call.1} parent=67 // pred_check
          %p1693 = pneg %p263
        $region70: #{tpu_custom_call.1} parent=67 // pred_check_branch
          %1695 = sbr.rel (%p1693) target = $region72
        $region71: #{tpu_custom_call.1} parent=67 // pred_region
          %s1696 = sand.u32 %s248, 1
          %s1697 = scalar_lea.sflag [#allocation4], %s1696
          %s1698 = sand.u32 %s248, 1
          %s1699 = smul.addr %s1698, 24
          %s1700 = scalar_lea.vmem [#allocation3], %s1699
          %1701 = dma.done %s1697, 384
        $region72: #{tpu_custom_call.1} parent=67 // pred_fallthru
          _
      $region68: #{tpu_custom_call.1} parent=5 // pred_fallthru
        _
    $region6: #{tpu_custom_call.1} parent=1 // loop_footer
      %s23 = sadd.s32 1, %s19
    $region7: #{tpu_custom_call.1} parent=1 // loop_footer_branch
      %18 = sbr.rel target = $region3
    $region8: #{tpu_custom_call.1} parent=1 // loop_exit
      _
    %1702 = vsyncpa [#allocation4], 1
    %s1703 = scalar_lea.sflag [#allocation4], 1
    %1704 = vsyncpa %s1703, 1

</llo_original>
